<compile_context>
chip_gen: v7x
topology: tpu7x:2x2x1
jax: 0.10.0
libtpu: 0.0.40
codegen_flags: <defaults>
</compile_context>

<pallas_src>
import functools
import numpy as np
import jax
import jax.numpy as jnp
from jax import lax
from jax.experimental import pallas as pl
from jax.experimental.pallas import tpu as pltpu

# MXU operand dtype. Accumulation is always float32. Set to jnp.float32 for
# full-precision matmuls (e.g. exact parity checks).
COMPUTE_DTYPE = jnp.bfloat16


# --------------------------------------------------------------------------
# Host-side helpers (numpy, trace-time only)
# --------------------------------------------------------------------------
def _upsample_coords(in_size, out_size):
    """PyTorch nn.Upsample(mode='bilinear', align_corners=False) source coords."""
    o = np.arange(out_size, dtype=np.float64)
    src = (o + 0.5) * (in_size / out_size) - 0.5
    src = np.maximum(src, 0.0)                      # PyTorch clamps src at 0
    i0 = np.minimum(np.floor(src), in_size - 1).astype(np.int32)
    lam = (src - i0).astype(np.float32)
    i1 = np.minimum(i0 + 1, in_size - 1).astype(np.int32)
    return i0, i1, lam


def _upsample_matrix(in_size):
    """(2*in, in) matrix A such that A @ x == bilinear x2 upsample along one axis."""
    out_size = 2 * in_size
    i0, i1, lam = _upsample_coords(in_size, out_size)
    a = np.zeros((out_size, in_size), np.float32)
    rows = np.arange(out_size)
    a[rows, i0] += 1.0 - lam
    a[rows, i1] += lam                               # i0 == i1 at borders -> 1.0
    return a


# --------------------------------------------------------------------------
# Fused Pallas kernel: upsample(x1) ++ x2  ->  zero-pad  ->  3x3 conv (folded
# BN scale)  ->  + shift  ->  ReLU, stored as a lane-dense (Cout, Ho*Wo) slab.
# --------------------------------------------------------------------------
def _upsample_cat_conv_bn_relu_kernel(
        x1_ref, x2_ref, ah_ref, aw_ref, w2_ref, shift_ref,   # inputs
        o_ref,                                                # output
        g_ref,                                                # VMEM scratch
        *, C1, C2, H, W, Cout):
    Ho, Wo = 2 * H, 2 * W
    Cin = C1 + C2
    L = Ho * Wo                    # dense output lane count (row-major (r, c))
    off0 = Wo + 1                  # first image lane in the flat scratch
    Lg = L + 2 * Wo + 2            # top guard (Wo+1) + image (L) + bottom guard (Wo+1)
    cdt = w2_ref.dtype             # MXU operand dtype (bf16 by default)

    # ---- flat padded layout: image pixel (r, x) lives at lane off0 + r*Wo + x;
    # the Wo+1 lanes on either side stay zero (vertical zero padding + the
    # tap-overreach guard).  Horizontal zero padding is handled by masks below.
    g_ref[...] = jnp.zeros(g_ref.shape, g_ref.dtype)

    # ---- x2 skip branch: already flat (C2, Ho*Wo) -> ONE contiguous store ----
    g_ref[0:C2, off0:off0 + L] = x2_ref[0]

    # ---- bilinear x2 upsample of x1 as two small batched MXU matmuls ----
    x1 = x1_ref[0].astype(cdt)                            # (C1, H, W)
    aw = jnp.broadcast_to(aw_ref[...], (C1, Wo, W))       # (C1, Wo, W)
    ah = jnp.broadcast_to(ah_ref[...], (C1, Ho, H))       # (C1, Ho, H)
    t = jnp.einsum('chw,cpw->chp', x1, aw,
                   preferred_element_type=jnp.float32)    # (C1, H, Wo)
    up = jnp.einsum('coh,chp->cop', ah, t.astype(cdt),
                    preferred_element_type=jnp.float32)   # (C1, Ho, Wo)
    for r in range(Ho):                                   # torch.cat([x2, x1], 1)
        base = off0 + r * Wo
        g_ref[C2:Cin, base:base + Wo] = up[:, r, :]

    # ---- horizontal-pad masks: a lane shift of the dense row-flattened image
    # wraps the last/first column of the neighbouring row into the pad
    # position; zero those columns once instead of widening every row.
    lane = lax.broadcasted_iota(jnp.int32, (1, Lg), 1)
    g = g_ref[...]                                        # (Cin, Lg) f32
    g_l = jnp.where(lane % Wo == 0, 0.0, g)               # kill wrapped col Wo-1
    g_r = jnp.where(lane % Wo == 1, 0.0, g)               # kill wrapped col 0

    # ---- 3x3 conv as ONE fat MXU matmul: (Cout, 9*Cin) @ (9*Cin, Ho*Wo) ----
    # Tap (dy, dx) for output lane l = r*Wo + c reads lane l + dy*Wo + dx of
    # (g_l, g, g_r)[dx]; lane-contiguous slices, no per-tap reshape.
    taps = []
    for dy in range(3):
        for dx, src in enumerate((g_l, g, g_r)):
            s = dy * Wo + dx
            taps.append(src[:, s:s + L])
    p9 = jnp.concatenate(taps, axis=0).astype(cdt)        # (9*Cin, Ho*Wo)
    acc = jnp.dot(w2_ref[...], p9,
                  preferred_element_type=jnp.float32)     # (Cout, Ho*Wo)

    # ---- folded-BN shift + ReLU, ONE lane-dense store ----
    o_ref[0] = jnp.maximum(acc + shift_ref[...], 0.0).astype(o_ref.dtype)


def upsample_conv_forward(x1_nchw, x2_nchw, params):
    """x1: (N, C1, H, W), x2: (N, C2, 2H, 2W) -> (N, Cout, 2H, 2W). NCHW end-to-end."""
    N, C1, H, W = x1_nchw.shape
    N2, C2, Ho, Wo = x2_nchw.shape
    assert N2 == N and Ho == 2 * H and Wo == 2 * W
    Cout = params["w2"].shape[0]
    Cin = C1 + C2
    assert params["w2"].shape[1] == 9 * Cin
    L = Ho * Wo
    Lg = L + 2 * Wo + 2

    ah = jnp.asarray(_upsample_matrix(H), COMPUTE_DTYPE)   # (Ho, H)
    aw = jnp.asarray(_upsample_matrix(W), COMPUTE_DTYPE)   # (Wo, W)
    x2_flat = x2_nchw.reshape(N, C2, L)                    # free layout change

    kernel = functools.partial(_upsample_cat_conv_bn_relu_kernel,
                               C1=C1, C2=C2, H=H, W=W, Cout=Cout)
    out_flat = pl.pallas_call(
        kernel,
        out_shape=jax.ShapeDtypeStruct((N, Cout, L), x1_nchw.dtype),
        grid=(N,),
        in_specs=[
            pl.BlockSpec((1, C1, H, W), lambda n: (n, 0, 0, 0)),
            pl.BlockSpec((1, C2, L), lambda n: (n, 0, 0)),
            pl.BlockSpec((Ho, H), lambda n: (0, 0)),
            pl.BlockSpec((Wo, W), lambda n: (0, 0)),
            pl.BlockSpec((Cout, 9 * Cin), lambda n: (0, 0)),
            pl.BlockSpec((Cout, 1), lambda n: (0, 0)),
        ],
        out_specs=pl.BlockSpec((1, Cout, L), lambda n: (n, 0, 0)),
        scratch_shapes=[pltpu.VMEM((Cin, Lg), jnp.float32)],
        compiler_params=pltpu.CompilerParams(
            dimension_semantics=("parallel",)),
    )(x1_nchw, x2_flat, ah, aw, params["w2"], params["shift_col"])
    return out_flat.reshape(N, Cout, Ho, Wo)               # free layout change


# --------------------------------------------------------------------------
# Parameters: Conv2d (bias=False) + BatchNorm2d folded in eval form.
# --------------------------------------------------------------------------
def init_params(key, in_channels, out_channels):
    kw, kg, kb, km, kv = jax.random.split(key, 5)
    w = 0.1 * jax.random.normal(kw, (out_channels, in_channels, 3, 3), jnp.float32)  # OIHW
    gamma = 1.0 + 0.1 * jax.random.normal(kg, (out_channels,), jnp.float32)
    beta = 0.1 * jax.random.normal(kb, (out_channels,), jnp.float32)
    running_mean = 0.05 * jax.random.normal(km, (out_channels,), jnp.float32)
    running_var = 1.0 + 0.1 * jax.random.uniform(kv, (out_channels,), jnp.float32)
    eps = 1e-5
    scale = gamma * jax.lax.rsqrt(running_var + eps)
    shift = beta - running_mean * scale
    # Fold the BN scale into the conv weight (free, host-side) and pre-pack the
    # (Cout, 9*Cin) im2col weight matrix, tap-major (dy, dx, ci), in bf16.
    w_folded = w * scale[:, None, None, None]
    w2 = jnp.reshape(jnp.transpose(w_folded, (0, 2, 3, 1)),       # (Cout,3,3,Cin)
                     (out_channels, 9 * in_channels)).astype(COMPUTE_DTYPE)
    return {"w": w, "scale": scale, "shift": shift,
            "w2": w2, "shift_col": shift.reshape(out_channels, 1)}


# --------------------------------------------------------------------------
# Pure-f32 reference (PyTorch semantics) for the correctness check.
# --------------------------------------------------------------------------
def reference_forward_f32(x1, x2, w, scale, shift):
    N, C1, H, W = x1.shape
    i0h, i1h, lh = _upsample_coords(H, 2 * H)
    i0w, i1w, lw = _upsample_coords(W, 2 * W)
    lh = jnp.asarray(lh)[None, None, :, None]
    lw = jnp.asarray(lw)[None, None, None, :]
    xh = x1[:, :, i0h, :] * (1.0 - lh) + x1[:, :, i1h, :] * lh
    xw = xh[:, :, :, i0w] * (1.0 - lw) + xh[:, :, :, i1w] * lw
    xcat = jnp.concatenate([x2, xw], axis=1)            # torch.cat([x2, x1], dim=1)
    y = lax.conv_general_dilated(xcat, w, (1, 1), "SAME",
                                 dimension_numbers=("NCHW", "OIHW", "NCHW"))
    y = y * scale[None, :, None, None] + shift[None, :, None, None]
    return jnp.maximum(y, 0.0)


if __name__ == "__main__":
    key = jax.random.PRNGKey(0)
    k1, k2, kp = jax.random.split(key, 3)

    N, C1, H, W = 2, 4, 16, 16      # x1 (to be upsampled x2)
    C2 = 4                          # x2 (skip connection at 2H x 2W)
    in_channels, out_channels = C1 + C2, 8

    x1 = jax.random.normal(k1, (N, C1, H, W), jnp.float32)
    x2 = jax.random.normal(k2, (N, C2, 2 * H, 2 * W), jnp.float32)
    params = init_params(kp, in_channels, out_channels)

    fwd = jax.jit(upsample_conv_forward)
    out = jax.block_until_ready(fwd(x1, x2, params))
    assert out.shape == (N, out_channels, 2 * H, 2 * W)

    ref = reference_forward_f32(x1, x2, params["w"], params["scale"], params["shift"])
    # Tolerance covers the bf16 operand rounding of the in-kernel matmuls
    # (accumulation is f32); with COMPUTE_DTYPE=float32 this matches to ~1e-5.
    np.testing.assert_allclose(np.asarray(out), np.asarray(ref),
                               atol=3e-2, rtol=3e-2)
    print("KERNEL_OK")
</pallas_src>

<mosaic_0001>
module attributes {stable_mosaic.version = 11 : i64} {
  func.func @_upsample_cat_conv_bn_relu_kernel(%arg0: i32, %arg1: memref<1x4x16x16xf32, #tpu.memory_space<vmem>>, %arg2: memref<1x4x1024xf32, #tpu.memory_space<vmem>>, %arg3: memref<32x16xbf16, #tpu.memory_space<vmem>>, %arg4: memref<32x16xbf16, #tpu.memory_space<vmem>>, %arg5: memref<8x72xbf16, #tpu.memory_space<vmem>>, %arg6: memref<8x1xf32, #tpu.memory_space<vmem>>, %arg7: memref<1x8x1024xf32, #tpu.memory_space<vmem>>, %arg8: memref<8x1090xf32, #tpu.memory_space<vmem>>) attributes {dimension_semantics = [#tpu.dimension_semantics<parallel>], iteration_bounds = array<i64: 2>, scalar_prefetch = 0 : i64, scratch_operands = 1 : i64, tpu.core_type = #tpu.core_type<tc>, window_params = [{transform_indices = @transform_0, window_bounds = array<i64: 1, 4, 16, 16>}, {transform_indices = @transform_1, window_bounds = array<i64: 1, 4, 1024>}, {pipeline_mode = #tpu.pipeline_mode<synchronous>, transform_indices = @transform_2, window_bounds = array<i64: 32, 16>}, {pipeline_mode = #tpu.pipeline_mode<synchronous>, transform_indices = @transform_3, window_bounds = array<i64: 32, 16>}, {pipeline_mode = #tpu.pipeline_mode<synchronous>, transform_indices = @transform_4, window_bounds = array<i64: 8, 72>}, {pipeline_mode = #tpu.pipeline_mode<synchronous>, transform_indices = @transform_5, window_bounds = array<i64: 8, 1>}, {transform_indices = @transform_6, window_bounds = array<i64: 1, 8, 1024>}]} {
    %cst = arith.constant 0.000000e+00 : f32
    %0 = vector.broadcast %cst : f32 to vector<8x1090xf32>
    %c0 = arith.constant 0 : index
    %c0_0 = arith.constant 0 : index
    %1 = vector.load %arg8[%c0, %c0_0] : memref<8x1090xf32, #tpu.memory_space<vmem>>, vector<8x1090xf32>
    tpu.vector_store %arg8[%c0, %c0_0], %0 {strides = array<i32>} : memref<8x1090xf32, #tpu.memory_space<vmem>>, vector<8x1090xf32>,
    %c0_1 = arith.constant 0 : index
    %c0_2 = arith.constant 0 : index
    %c0_3 = arith.constant 0 : index
    %2 = vector.load %arg2[%c0_1, %c0_2, %c0_3] : memref<1x4x1024xf32, #tpu.memory_space<vmem>>, vector<1x4x1024xf32>
    %3 = vector.shape_cast %2 : vector<1x4x1024xf32> to vector<4x1024xf32>
    %c0_4 = arith.constant 0 : index
    %c33 = arith.constant 33 : index
    %4 = vector.load %arg8[%c0_4, %c33] : memref<8x1090xf32, #tpu.memory_space<vmem>>, vector<4x1024xf32>
    tpu.vector_store %arg8[%c0_4, %c33], %3 {strides = array<i32>} : memref<8x1090xf32, #tpu.memory_space<vmem>>, vector<4x1024xf32>,
    %c0_5 = arith.constant 0 : index
    %c0_6 = arith.constant 0 : index
    %c0_7 = arith.constant 0 : index
    %c0_8 = arith.constant 0 : index
    %5 = vector.load %arg1[%c0_5, %c0_6, %c0_7, %c0_8] : memref<1x4x16x16xf32, #tpu.memory_space<vmem>>, vector<1x4x16x16xf32>
    %6 = vector.shape_cast %5 : vector<1x4x16x16xf32> to vector<4x16x16xf32>
    %7 = arith.truncf %6 : vector<4x16x16xf32> to vector<4x16x16xbf16>
    %c0_9 = arith.constant 0 : index
    %c0_10 = arith.constant 0 : index
    %8 = vector.load %arg4[%c0_9, %c0_10] : memref<32x16xbf16, #tpu.memory_space<vmem>>, vector<32x16xbf16>
    %9 = vector.shape_cast %8 : vector<32x16xbf16> to vector<1x32x16xbf16>
    %10 = vector.broadcast %9 : vector<1x32x16xbf16> to vector<4x32x16xbf16>
    %c0_11 = arith.constant 0 : index
    %c0_12 = arith.constant 0 : index
    %11 = vector.load %arg3[%c0_11, %c0_12] : memref<32x16xbf16, #tpu.memory_space<vmem>>, vector<32x16xbf16>
    %12 = vector.shape_cast %11 : vector<32x16xbf16> to vector<1x32x16xbf16>
    %13 = vector.broadcast %12 : vector<1x32x16xbf16> to vector<4x32x16xbf16>
    "tpu.trace_start"() <{level = 10 : i32, message = "chw,cpw->chp"}> : () -> ()
    %cst_13 = arith.constant dense<0.000000e+00> : vector<4x16x32xf32>
    %14 = tpu.matmul %7, %10, %cst_13 {dimension_numbers = #tpu.dot_dimension_numbers<[2], [2], [1], [1], [0, 0, 0, 1, 1, 1], [0], [0]>} : vector<4x16x16xbf16>, vector<4x32x16xbf16>, vector<4x16x32xf32> -> vector<4x16x32xf32>
    "tpu.trace_stop"() : () -> ()
    %15 = arith.truncf %14 : vector<4x16x32xf32> to vector<4x16x32xbf16>
    "tpu.trace_start"() <{level = 10 : i32, message = "coh,chp->cop"}> : () -> ()
    %cst_14 = arith.constant dense<0.000000e+00> : vector<4x32x32xf32>
    %16 = tpu.matmul %13, %15, %cst_14 {dimension_numbers = #tpu.dot_dimension_numbers<[2], [1], [1], [2], [0, 0, 0, 1, 1, 2], [0], [0]>} : vector<4x32x16xbf16>, vector<4x16x32xbf16>, vector<4x32x32xf32> -> vector<4x32x32xf32>
    "tpu.trace_stop"() : () -> ()
    %17 = vector.extract_strided_slice %16 {offsets = [0, 0, 0], sizes = [4, 1, 32], strides = [1, 1, 1]} : vector<4x32x32xf32> to vector<4x1x32xf32>
    %18 = vector.shape_cast %17 : vector<4x1x32xf32> to vector<4x32xf32>
    %c4 = arith.constant 4 : index
    %c33_15 = arith.constant 33 : index
    %19 = vector.load %arg8[%c4, %c33_15] : memref<8x1090xf32, #tpu.memory_space<vmem>>, vector<4x32xf32>
    tpu.vector_store %arg8[%c4, %c33_15], %18 {strides = array<i32>} : memref<8x1090xf32, #tpu.memory_space<vmem>>, vector<4x32xf32>,
    %20 = vector.extract_strided_slice %16 {offsets = [0, 1, 0], sizes = [4, 1, 32], strides = [1, 1, 1]} : vector<4x32x32xf32> to vector<4x1x32xf32>
    %21 = vector.shape_cast %20 : vector<4x1x32xf32> to vector<4x32xf32>
    %c4_16 = arith.constant 4 : index
    %c65 = arith.constant 65 : index
    %22 = vector.load %arg8[%c4_16, %c65] : memref<8x1090xf32, #tpu.memory_space<vmem>>, vector<4x32xf32>
    tpu.vector_store %arg8[%c4_16, %c65], %21 {strides = array<i32>} : memref<8x1090xf32, #tpu.memory_space<vmem>>, vector<4x32xf32>,
    %23 = vector.extract_strided_slice %16 {offsets = [0, 2, 0], sizes = [4, 1, 32], strides = [1, 1, 1]} : vector<4x32x32xf32> to vector<4x1x32xf32>
    %24 = vector.shape_cast %23 : vector<4x1x32xf32> to vector<4x32xf32>
    %c4_17 = arith.constant 4 : index
    %c97 = arith.constant 97 : index
    %25 = vector.load %arg8[%c4_17, %c97] : memref<8x1090xf32, #tpu.memory_space<vmem>>, vector<4x32xf32>
    tpu.vector_store %arg8[%c4_17, %c97], %24 {strides = array<i32>} : memref<8x1090xf32, #tpu.memory_space<vmem>>, vector<4x32xf32>,
    %26 = vector.extract_strided_slice %16 {offsets = [0, 3, 0], sizes = [4, 1, 32], strides = [1, 1, 1]} : vector<4x32x32xf32> to vector<4x1x32xf32>
    %27 = vector.shape_cast %26 : vector<4x1x32xf32> to vector<4x32xf32>
    %c4_18 = arith.constant 4 : index
    %c129 = arith.constant 129 : index
    %28 = vector.load %arg8[%c4_18, %c129] : memref<8x1090xf32, #tpu.memory_space<vmem>>, vector<4x32xf32>
    tpu.vector_store %arg8[%c4_18, %c129], %27 {strides = array<i32>} : memref<8x1090xf32, #tpu.memory_space<vmem>>, vector<4x32xf32>,
    %29 = vector.extract_strided_slice %16 {offsets = [0, 4, 0], sizes = [4, 1, 32], strides = [1, 1, 1]} : vector<4x32x32xf32> to vector<4x1x32xf32>
    %30 = vector.shape_cast %29 : vector<4x1x32xf32> to vector<4x32xf32>
    %c4_19 = arith.constant 4 : index
    %c161 = arith.constant 161 : index
    %31 = vector.load %arg8[%c4_19, %c161] : memref<8x1090xf32, #tpu.memory_space<vmem>>, vector<4x32xf32>
    tpu.vector_store %arg8[%c4_19, %c161], %30 {strides = array<i32>} : memref<8x1090xf32, #tpu.memory_space<vmem>>, vector<4x32xf32>,
    %32 = vector.extract_strided_slice %16 {offsets = [0, 5, 0], sizes = [4, 1, 32], strides = [1, 1, 1]} : vector<4x32x32xf32> to vector<4x1x32xf32>
    %33 = vector.shape_cast %32 : vector<4x1x32xf32> to vector<4x32xf32>
    %c4_20 = arith.constant 4 : index
    %c193 = arith.constant 193 : index
    %34 = vector.load %arg8[%c4_20, %c193] : memref<8x1090xf32, #tpu.memory_space<vmem>>, vector<4x32xf32>
    tpu.vector_store %arg8[%c4_20, %c193], %33 {strides = array<i32>} : memref<8x1090xf32, #tpu.memory_space<vmem>>, vector<4x32xf32>,
    %35 = vector.extract_strided_slice %16 {offsets = [0, 6, 0], sizes = [4, 1, 32], strides = [1, 1, 1]} : vector<4x32x32xf32> to vector<4x1x32xf32>
    %36 = vector.shape_cast %35 : vector<4x1x32xf32> to vector<4x32xf32>
    %c4_21 = arith.constant 4 : index
    %c225 = arith.constant 225 : index
    %37 = vector.load %arg8[%c4_21, %c225] : memref<8x1090xf32, #tpu.memory_space<vmem>>, vector<4x32xf32>
    tpu.vector_store %arg8[%c4_21, %c225], %36 {strides = array<i32>} : memref<8x1090xf32, #tpu.memory_space<vmem>>, vector<4x32xf32>,
    %38 = vector.extract_strided_slice %16 {offsets = [0, 7, 0], sizes = [4, 1, 32], strides = [1, 1, 1]} : vector<4x32x32xf32> to vector<4x1x32xf32>
    %39 = vector.shape_cast %38 : vector<4x1x32xf32> to vector<4x32xf32>
    %c4_22 = arith.constant 4 : index
    %c257 = arith.constant 257 : index
    %40 = vector.load %arg8[%c4_22, %c257] : memref<8x1090xf32, #tpu.memory_space<vmem>>, vector<4x32xf32>
    tpu.vector_store %arg8[%c4_22, %c257], %39 {strides = array<i32>} : memref<8x1090xf32, #tpu.memory_space<vmem>>, vector<4x32xf32>,
    %41 = vector.extract_strided_slice %16 {offsets = [0, 8, 0], sizes = [4, 1, 32], strides = [1, 1, 1]} : vector<4x32x32xf32> to vector<4x1x32xf32>
    %42 = vector.shape_cast %41 : vector<4x1x32xf32> to vector<4x32xf32>
    %c4_23 = arith.constant 4 : index
    %c289 = arith.constant 289 : index
    %43 = vector.load %arg8[%c4_23, %c289] : memref<8x1090xf32, #tpu.memory_space<vmem>>, vector<4x32xf32>
    tpu.vector_store %arg8[%c4_23, %c289], %42 {strides = array<i32>} : memref<8x1090xf32, #tpu.memory_space<vmem>>, vector<4x32xf32>,
    %44 = vector.extract_strided_slice %16 {offsets = [0, 9, 0], sizes = [4, 1, 32], strides = [1, 1, 1]} : vector<4x32x32xf32> to vector<4x1x32xf32>
    %45 = vector.shape_cast %44 : vector<4x1x32xf32> to vector<4x32xf32>
    %c4_24 = arith.constant 4 : index
    %c321 = arith.constant 321 : index
    %46 = vector.load %arg8[%c4_24, %c321] : memref<8x1090xf32, #tpu.memory_space<vmem>>, vector<4x32xf32>
    tpu.vector_store %arg8[%c4_24, %c321], %45 {strides = array<i32>} : memref<8x1090xf32, #tpu.memory_space<vmem>>, vector<4x32xf32>,
    %47 = vector.extract_strided_slice %16 {offsets = [0, 10, 0], sizes = [4, 1, 32], strides = [1, 1, 1]} : vector<4x32x32xf32> to vector<4x1x32xf32>
    %48 = vector.shape_cast %47 : vector<4x1x32xf32> to vector<4x32xf32>
    %c4_25 = arith.constant 4 : index
    %c353 = arith.constant 353 : index
    %49 = vector.load %arg8[%c4_25, %c353] : memref<8x1090xf32, #tpu.memory_space<vmem>>, vector<4x32xf32>
    tpu.vector_store %arg8[%c4_25, %c353], %48 {strides = array<i32>} : memref<8x1090xf32, #tpu.memory_space<vmem>>, vector<4x32xf32>,
    %50 = vector.extract_strided_slice %16 {offsets = [0, 11, 0], sizes = [4, 1, 32], strides = [1, 1, 1]} : vector<4x32x32xf32> to vector<4x1x32xf32>
    %51 = vector.shape_cast %50 : vector<4x1x32xf32> to vector<4x32xf32>
    %c4_26 = arith.constant 4 : index
    %c385 = arith.constant 385 : index
    %52 = vector.load %arg8[%c4_26, %c385] : memref<8x1090xf32, #tpu.memory_space<vmem>>, vector<4x32xf32>
    tpu.vector_store %arg8[%c4_26, %c385], %51 {strides = array<i32>} : memref<8x1090xf32, #tpu.memory_space<vmem>>, vector<4x32xf32>,
    %53 = vector.extract_strided_slice %16 {offsets = [0, 12, 0], sizes = [4, 1, 32], strides = [1, 1, 1]} : vector<4x32x32xf32> to vector<4x1x32xf32>
    %54 = vector.shape_cast %53 : vector<4x1x32xf32> to vector<4x32xf32>
    %c4_27 = arith.constant 4 : index
    %c417 = arith.constant 417 : index
    %55 = vector.load %arg8[%c4_27, %c417] : memref<8x1090xf32, #tpu.memory_space<vmem>>, vector<4x32xf32>
    tpu.vector_store %arg8[%c4_27, %c417], %54 {strides = array<i32>} : memref<8x1090xf32, #tpu.memory_space<vmem>>, vector<4x32xf32>,
    %56 = vector.extract_strided_slice %16 {offsets = [0, 13, 0], sizes = [4, 1, 32], strides = [1, 1, 1]} : vector<4x32x32xf32> to vector<4x1x32xf32>
    %57 = vector.shape_cast %56 : vector<4x1x32xf32> to vector<4x32xf32>
    %c4_28 = arith.constant 4 : index
    %c449 = arith.constant 449 : index
    %58 = vector.load %arg8[%c4_28, %c449] : memref<8x1090xf32, #tpu.memory_space<vmem>>, vector<4x32xf32>
    tpu.vector_store %arg8[%c4_28, %c449], %57 {strides = array<i32>} : memref<8x1090xf32, #tpu.memory_space<vmem>>, vector<4x32xf32>,
    %59 = vector.extract_strided_slice %16 {offsets = [0, 14, 0], sizes = [4, 1, 32], strides = [1, 1, 1]} : vector<4x32x32xf32> to vector<4x1x32xf32>
    %60 = vector.shape_cast %59 : vector<4x1x32xf32> to vector<4x32xf32>
    %c4_29 = arith.constant 4 : index
    %c481 = arith.constant 481 : index
    %61 = vector.load %arg8[%c4_29, %c481] : memref<8x1090xf32, #tpu.memory_space<vmem>>, vector<4x32xf32>
    tpu.vector_store %arg8[%c4_29, %c481], %60 {strides = array<i32>} : memref<8x1090xf32, #tpu.memory_space<vmem>>, vector<4x32xf32>,
    %62 = vector.extract_strided_slice %16 {offsets = [0, 15, 0], sizes = [4, 1, 32], strides = [1, 1, 1]} : vector<4x32x32xf32> to vector<4x1x32xf32>
    %63 = vector.shape_cast %62 : vector<4x1x32xf32> to vector<4x32xf32>
    %c4_30 = arith.constant 4 : index
    %c513 = arith.constant 513 : index
    %64 = vector.load %arg8[%c4_30, %c513] : memref<8x1090xf32, #tpu.memory_space<vmem>>, vector<4x32xf32>
    tpu.vector_store %arg8[%c4_30, %c513], %63 {strides = array<i32>} : memref<8x1090xf32, #tpu.memory_space<vmem>>, vector<4x32xf32>,
    %65 = vector.extract_strided_slice %16 {offsets = [0, 16, 0], sizes = [4, 1, 32], strides = [1, 1, 1]} : vector<4x32x32xf32> to vector<4x1x32xf32>
    %66 = vector.shape_cast %65 : vector<4x1x32xf32> to vector<4x32xf32>
    %c4_31 = arith.constant 4 : index
    %c545 = arith.constant 545 : index
    %67 = vector.load %arg8[%c4_31, %c545] : memref<8x1090xf32, #tpu.memory_space<vmem>>, vector<4x32xf32>
    tpu.vector_store %arg8[%c4_31, %c545], %66 {strides = array<i32>} : memref<8x1090xf32, #tpu.memory_space<vmem>>, vector<4x32xf32>,
    %68 = vector.extract_strided_slice %16 {offsets = [0, 17, 0], sizes = [4, 1, 32], strides = [1, 1, 1]} : vector<4x32x32xf32> to vector<4x1x32xf32>
    %69 = vector.shape_cast %68 : vector<4x1x32xf32> to vector<4x32xf32>
    %c4_32 = arith.constant 4 : index
    %c577 = arith.constant 577 : index
    %70 = vector.load %arg8[%c4_32, %c577] : memref<8x1090xf32, #tpu.memory_space<vmem>>, vector<4x32xf32>
    tpu.vector_store %arg8[%c4_32, %c577], %69 {strides = array<i32>} : memref<8x1090xf32, #tpu.memory_space<vmem>>, vector<4x32xf32>,
    %71 = vector.extract_strided_slice %16 {offsets = [0, 18, 0], sizes = [4, 1, 32], strides = [1, 1, 1]} : vector<4x32x32xf32> to vector<4x1x32xf32>
    %72 = vector.shape_cast %71 : vector<4x1x32xf32> to vector<4x32xf32>
    %c4_33 = arith.constant 4 : index
    %c609 = arith.constant 609 : index
    %73 = vector.load %arg8[%c4_33, %c609] : memref<8x1090xf32, #tpu.memory_space<vmem>>, vector<4x32xf32>
    tpu.vector_store %arg8[%c4_33, %c609], %72 {strides = array<i32>} : memref<8x1090xf32, #tpu.memory_space<vmem>>, vector<4x32xf32>,
    %74 = vector.extract_strided_slice %16 {offsets = [0, 19, 0], sizes = [4, 1, 32], strides = [1, 1, 1]} : vector<4x32x32xf32> to vector<4x1x32xf32>
    %75 = vector.shape_cast %74 : vector<4x1x32xf32> to vector<4x32xf32>
    %c4_34 = arith.constant 4 : index
    %c641 = arith.constant 641 : index
    %76 = vector.load %arg8[%c4_34, %c641] : memref<8x1090xf32, #tpu.memory_space<vmem>>, vector<4x32xf32>
    tpu.vector_store %arg8[%c4_34, %c641], %75 {strides = array<i32>} : memref<8x1090xf32, #tpu.memory_space<vmem>>, vector<4x32xf32>,
    %77 = vector.extract_strided_slice %16 {offsets = [0, 20, 0], sizes = [4, 1, 32], strides = [1, 1, 1]} : vector<4x32x32xf32> to vector<4x1x32xf32>
    %78 = vector.shape_cast %77 : vector<4x1x32xf32> to vector<4x32xf32>
    %c4_35 = arith.constant 4 : index
    %c673 = arith.constant 673 : index
    %79 = vector.load %arg8[%c4_35, %c673] : memref<8x1090xf32, #tpu.memory_space<vmem>>, vector<4x32xf32>
    tpu.vector_store %arg8[%c4_35, %c673], %78 {strides = array<i32>} : memref<8x1090xf32, #tpu.memory_space<vmem>>, vector<4x32xf32>,
    %80 = vector.extract_strided_slice %16 {offsets = [0, 21, 0], sizes = [4, 1, 32], strides = [1, 1, 1]} : vector<4x32x32xf32> to vector<4x1x32xf32>
    %81 = vector.shape_cast %80 : vector<4x1x32xf32> to vector<4x32xf32>
    %c4_36 = arith.constant 4 : index
    %c705 = arith.constant 705 : index
    %82 = vector.load %arg8[%c4_36, %c705] : memref<8x1090xf32, #tpu.memory_space<vmem>>, vector<4x32xf32>
    tpu.vector_store %arg8[%c4_36, %c705], %81 {strides = array<i32>} : memref<8x1090xf32, #tpu.memory_space<vmem>>, vector<4x32xf32>,
    %83 = vector.extract_strided_slice %16 {offsets = [0, 22, 0], sizes = [4, 1, 32], strides = [1, 1, 1]} : vector<4x32x32xf32> to vector<4x1x32xf32>
    %84 = vector.shape_cast %83 : vector<4x1x32xf32> to vector<4x32xf32>
    %c4_37 = arith.constant 4 : index
    %c737 = arith.constant 737 : index
    %85 = vector.load %arg8[%c4_37, %c737] : memref<8x1090xf32, #tpu.memory_space<vmem>>, vector<4x32xf32>
    tpu.vector_store %arg8[%c4_37, %c737], %84 {strides = array<i32>} : memref<8x1090xf32, #tpu.memory_space<vmem>>, vector<4x32xf32>,
    %86 = vector.extract_strided_slice %16 {offsets = [0, 23, 0], sizes = [4, 1, 32], strides = [1, 1, 1]} : vector<4x32x32xf32> to vector<4x1x32xf32>
    %87 = vector.shape_cast %86 : vector<4x1x32xf32> to vector<4x32xf32>
    %c4_38 = arith.constant 4 : index
    %c769 = arith.constant 769 : index
    %88 = vector.load %arg8[%c4_38, %c769] : memref<8x1090xf32, #tpu.memory_space<vmem>>, vector<4x32xf32>
    tpu.vector_store %arg8[%c4_38, %c769], %87 {strides = array<i32>} : memref<8x1090xf32, #tpu.memory_space<vmem>>, vector<4x32xf32>,
    %89 = vector.extract_strided_slice %16 {offsets = [0, 24, 0], sizes = [4, 1, 32], strides = [1, 1, 1]} : vector<4x32x32xf32> to vector<4x1x32xf32>
    %90 = vector.shape_cast %89 : vector<4x1x32xf32> to vector<4x32xf32>
    %c4_39 = arith.constant 4 : index
    %c801 = arith.constant 801 : index
    %91 = vector.load %arg8[%c4_39, %c801] : memref<8x1090xf32, #tpu.memory_space<vmem>>, vector<4x32xf32>
    tpu.vector_store %arg8[%c4_39, %c801], %90 {strides = array<i32>} : memref<8x1090xf32, #tpu.memory_space<vmem>>, vector<4x32xf32>,
    %92 = vector.extract_strided_slice %16 {offsets = [0, 25, 0], sizes = [4, 1, 32], strides = [1, 1, 1]} : vector<4x32x32xf32> to vector<4x1x32xf32>
    %93 = vector.shape_cast %92 : vector<4x1x32xf32> to vector<4x32xf32>
    %c4_40 = arith.constant 4 : index
    %c833 = arith.constant 833 : index
    %94 = vector.load %arg8[%c4_40, %c833] : memref<8x1090xf32, #tpu.memory_space<vmem>>, vector<4x32xf32>
    tpu.vector_store %arg8[%c4_40, %c833], %93 {strides = array<i32>} : memref<8x1090xf32, #tpu.memory_space<vmem>>, vector<4x32xf32>,
    %95 = vector.extract_strided_slice %16 {offsets = [0, 26, 0], sizes = [4, 1, 32], strides = [1, 1, 1]} : vector<4x32x32xf32> to vector<4x1x32xf32>
    %96 = vector.shape_cast %95 : vector<4x1x32xf32> to vector<4x32xf32>
    %c4_41 = arith.constant 4 : index
    %c865 = arith.constant 865 : index
    %97 = vector.load %arg8[%c4_41, %c865] : memref<8x1090xf32, #tpu.memory_space<vmem>>, vector<4x32xf32>
    tpu.vector_store %arg8[%c4_41, %c865], %96 {strides = array<i32>} : memref<8x1090xf32, #tpu.memory_space<vmem>>, vector<4x32xf32>,
    %98 = vector.extract_strided_slice %16 {offsets = [0, 27, 0], sizes = [4, 1, 32], strides = [1, 1, 1]} : vector<4x32x32xf32> to vector<4x1x32xf32>
    %99 = vector.shape_cast %98 : vector<4x1x32xf32> to vector<4x32xf32>
    %c4_42 = arith.constant 4 : index
    %c897 = arith.constant 897 : index
    %100 = vector.load %arg8[%c4_42, %c897] : memref<8x1090xf32, #tpu.memory_space<vmem>>, vector<4x32xf32>
    tpu.vector_store %arg8[%c4_42, %c897], %99 {strides = array<i32>} : memref<8x1090xf32, #tpu.memory_space<vmem>>, vector<4x32xf32>,
    %101 = vector.extract_strided_slice %16 {offsets = [0, 28, 0], sizes = [4, 1, 32], strides = [1, 1, 1]} : vector<4x32x32xf32> to vector<4x1x32xf32>
    %102 = vector.shape_cast %101 : vector<4x1x32xf32> to vector<4x32xf32>
    %c4_43 = arith.constant 4 : index
    %c929 = arith.constant 929 : index
    %103 = vector.load %arg8[%c4_43, %c929] : memref<8x1090xf32, #tpu.memory_space<vmem>>, vector<4x32xf32>
    tpu.vector_store %arg8[%c4_43, %c929], %102 {strides = array<i32>} : memref<8x1090xf32, #tpu.memory_space<vmem>>, vector<4x32xf32>,
    %104 = vector.extract_strided_slice %16 {offsets = [0, 29, 0], sizes = [4, 1, 32], strides = [1, 1, 1]} : vector<4x32x32xf32> to vector<4x1x32xf32>
    %105 = vector.shape_cast %104 : vector<4x1x32xf32> to vector<4x32xf32>
    %c4_44 = arith.constant 4 : index
    %c961 = arith.constant 961 : index
    %106 = vector.load %arg8[%c4_44, %c961] : memref<8x1090xf32, #tpu.memory_space<vmem>>, vector<4x32xf32>
    tpu.vector_store %arg8[%c4_44, %c961], %105 {strides = array<i32>} : memref<8x1090xf32, #tpu.memory_space<vmem>>, vector<4x32xf32>,
    %107 = vector.extract_strided_slice %16 {offsets = [0, 30, 0], sizes = [4, 1, 32], strides = [1, 1, 1]} : vector<4x32x32xf32> to vector<4x1x32xf32>
    %108 = vector.shape_cast %107 : vector<4x1x32xf32> to vector<4x32xf32>
    %c4_45 = arith.constant 4 : index
    %c993 = arith.constant 993 : index
    %109 = vector.load %arg8[%c4_45, %c993] : memref<8x1090xf32, #tpu.memory_space<vmem>>, vector<4x32xf32>
    tpu.vector_store %arg8[%c4_45, %c993], %108 {strides = array<i32>} : memref<8x1090xf32, #tpu.memory_space<vmem>>, vector<4x32xf32>,
    %110 = vector.extract_strided_slice %16 {offsets = [0, 31, 0], sizes = [4, 1, 32], strides = [1, 1, 1]} : vector<4x32x32xf32> to vector<4x1x32xf32>
    %111 = vector.shape_cast %110 : vector<4x1x32xf32> to vector<4x32xf32>
    %c4_46 = arith.constant 4 : index
    %c1025 = arith.constant 1025 : index
    %112 = vector.load %arg8[%c4_46, %c1025] : memref<8x1090xf32, #tpu.memory_space<vmem>>, vector<4x32xf32>
    tpu.vector_store %arg8[%c4_46, %c1025], %111 {strides = array<i32>} : memref<8x1090xf32, #tpu.memory_space<vmem>>, vector<4x32xf32>,
    %113 = tpu.iota {dimensions = array<i32: 1>} : vector<1x1090xi32>
    %c0_47 = arith.constant 0 : index
    %c0_48 = arith.constant 0 : index
    %114 = vector.load %arg8[%c0_47, %c0_48] : memref<8x1090xf32, #tpu.memory_space<vmem>>, vector<8x1090xf32>
    %c32_i32 = arith.constant 32 : i32
    %c0_i32 = arith.constant 0 : i32
    %115 = arith.cmpi eq, %c32_i32, %c0_i32 : i32
    %c1_i32 = arith.constant 1 : i32
    %116 = arith.select %115, %c1_i32, %c32_i32 : i32
    %117 = vector.broadcast %116 : i32 to vector<1x1090xi32>
    %118 = arith.remsi %113, %117 : vector<1x1090xi32>
    %c0_i32_49 = arith.constant 0 : i32
    %119 = vector.broadcast %c0_i32_49 : i32 to vector<1x1090xi32>
    %120 = arith.cmpi ne, %118, %119 : vector<1x1090xi32>
    %c0_i32_50 = arith.constant 0 : i32
    %121 = vector.broadcast %c0_i32_50 : i32 to vector<1x1090xi32>
    %122 = arith.cmpi slt, %118, %121 : vector<1x1090xi32>
    %c0_i32_51 = arith.constant 0 : i32
    %123 = arith.cmpi slt, %116, %c0_i32_51 : i32
    %124 = vector.broadcast %123 : i1 to vector<1x1090xi1>
    %125 = vector.broadcast %124 : vector<1x1090xi1> to vector<1x1090xi1>
    %126 = arith.xori %122, %125 : vector<1x1090xi1>
    %127 = arith.andi %126, %120 : vector<1x1090xi1>
    %128 = vector.broadcast %116 : i32 to vector<1x1090xi32>
    %129 = arith.addi %118, %128 : vector<1x1090xi32>
    %130 = arith.select %127, %129, %118 : vector<1x1090xi1>, vector<1x1090xi32>
    %c0_i32_52 = arith.constant 0 : i32
    %131 = vector.broadcast %c0_i32_52 : i32 to vector<1x1090xi32>
    %132 = arith.cmpi eq, %130, %131 : vector<1x1090xi32>
    %cst_53 = arith.constant 0.000000e+00 : f32
    %133 = vector.shape_cast %132 : vector<1x1090xi1> to vector<1x1090xi1>
    %134 = vector.broadcast %133 : vector<1x1090xi1> to vector<8x1090xi1>
    %135 = vector.broadcast %cst_53 : f32 to vector<8x1090xf32>
    %136 = arith.select %134, %135, %114 : vector<8x1090xi1>, vector<8x1090xf32>
    %c32_i32_54 = arith.constant 32 : i32
    %c0_i32_55 = arith.constant 0 : i32
    %137 = arith.cmpi eq, %c32_i32_54, %c0_i32_55 : i32
    %c1_i32_56 = arith.constant 1 : i32
    %138 = arith.select %137, %c1_i32_56, %c32_i32_54 : i32
    %139 = vector.broadcast %138 : i32 to vector<1x1090xi32>
    %140 = arith.remsi %113, %139 : vector<1x1090xi32>
    %c0_i32_57 = arith.constant 0 : i32
    %141 = vector.broadcast %c0_i32_57 : i32 to vector<1x1090xi32>
    %142 = arith.cmpi ne, %140, %141 : vector<1x1090xi32>
    %c0_i32_58 = arith.constant 0 : i32
    %143 = vector.broadcast %c0_i32_58 : i32 to vector<1x1090xi32>
    %144 = arith.cmpi slt, %140, %143 : vector<1x1090xi32>
    %c0_i32_59 = arith.constant 0 : i32
    %145 = arith.cmpi slt, %138, %c0_i32_59 : i32
    %146 = vector.broadcast %145 : i1 to vector<1x1090xi1>
    %147 = vector.broadcast %146 : vector<1x1090xi1> to vector<1x1090xi1>
    %148 = arith.xori %144, %147 : vector<1x1090xi1>
    %149 = arith.andi %148, %142 : vector<1x1090xi1>
    %150 = vector.broadcast %138 : i32 to vector<1x1090xi32>
    %151 = arith.addi %140, %150 : vector<1x1090xi32>
    %152 = arith.select %149, %151, %140 : vector<1x1090xi1>, vector<1x1090xi32>
    %c1_i32_60 = arith.constant 1 : i32
    %153 = vector.broadcast %c1_i32_60 : i32 to vector<1x1090xi32>
    %154 = arith.cmpi eq, %152, %153 : vector<1x1090xi32>
    %cst_61 = arith.constant 0.000000e+00 : f32
    %155 = vector.shape_cast %154 : vector<1x1090xi1> to vector<1x1090xi1>
    %156 = vector.broadcast %155 : vector<1x1090xi1> to vector<8x1090xi1>
    %157 = vector.broadcast %cst_61 : f32 to vector<8x1090xf32>
    %158 = arith.select %156, %157, %114 : vector<8x1090xi1>, vector<8x1090xf32>
    %159 = vector.extract_strided_slice %136 {offsets = [0, 0], sizes = [8, 1024], strides = [1, 1]} : vector<8x1090xf32> to vector<8x1024xf32>
    %160 = vector.extract_strided_slice %114 {offsets = [0, 1], sizes = [8, 1024], strides = [1, 1]} : vector<8x1090xf32> to vector<8x1024xf32>
    %161 = vector.extract_strided_slice %158 {offsets = [0, 2], sizes = [8, 1024], strides = [1, 1]} : vector<8x1090xf32> to vector<8x1024xf32>
    %162 = vector.extract_strided_slice %136 {offsets = [0, 32], sizes = [8, 1024], strides = [1, 1]} : vector<8x1090xf32> to vector<8x1024xf32>
    %163 = vector.extract_strided_slice %114 {offsets = [0, 33], sizes = [8, 1024], strides = [1, 1]} : vector<8x1090xf32> to vector<8x1024xf32>
    %164 = vector.extract_strided_slice %158 {offsets = [0, 34], sizes = [8, 1024], strides = [1, 1]} : vector<8x1090xf32> to vector<8x1024xf32>
    %165 = vector.extract_strided_slice %136 {offsets = [0, 64], sizes = [8, 1024], strides = [1, 1]} : vector<8x1090xf32> to vector<8x1024xf32>
    %166 = vector.extract_strided_slice %114 {offsets = [0, 65], sizes = [8, 1024], strides = [1, 1]} : vector<8x1090xf32> to vector<8x1024xf32>
    %167 = vector.extract_strided_slice %158 {offsets = [0, 66], sizes = [8, 1024], strides = [1, 1]} : vector<8x1090xf32> to vector<8x1024xf32>
    %168 = tpu.concatenate %159, %160, %161, %162, %163, %164, %165, %166, %167 in 0 : vector<8x1024xf32>, vector<8x1024xf32>, vector<8x1024xf32>, vector<8x1024xf32>, vector<8x1024xf32>, vector<8x1024xf32>, vector<8x1024xf32>, vector<8x1024xf32>, vector<8x1024xf32> -> vector<72x1024xf32>
    %169 = arith.truncf %168 : vector<72x1024xf32> to vector<72x1024xbf16>
    %c0_62 = arith.constant 0 : index
    %c0_63 = arith.constant 0 : index
    %170 = vector.load %arg5[%c0_62, %c0_63] : memref<8x72xbf16, #tpu.memory_space<vmem>>, vector<8x72xbf16>
    %cst_64 = arith.constant dense<0.000000e+00> : vector<8x1024xf32>
    %171 = tpu.matmul %170, %169, %cst_64 {dimension_numbers = #tpu.dot_dimension_numbers<[1], [0], [0], [1], [0, 0, 1, 1], [], []>} : vector<8x72xbf16>, vector<72x1024xbf16>, vector<8x1024xf32> -> vector<8x1024xf32>
    %c0_65 = arith.constant 0 : index
    %c0_66 = arith.constant 0 : index
    %172 = vector.load %arg6[%c0_65, %c0_66] : memref<8x1xf32, #tpu.memory_space<vmem>>, vector<8x1xf32>
    %173 = vector.broadcast %172 : vector<8x1xf32> to vector<8x1024xf32>
    %174 = arith.addf %171, %173 : vector<8x1024xf32>
    %cst_67 = arith.constant 0.000000e+00 : f32
    %175 = vector.broadcast %cst_67 : f32 to vector<8x1024xf32>
    %176 = arith.maximumf %174, %175 : vector<8x1024xf32>
    %c0_68 = arith.constant 0 : index
    %c0_69 = arith.constant 0 : index
    %c0_70 = arith.constant 0 : index
    %177 = vector.load %arg7[%c0_68, %c0_69, %c0_70] : memref<1x8x1024xf32, #tpu.memory_space<vmem>>, vector<1x8x1024xf32>
    %178 = vector.shape_cast %177 : vector<1x8x1024xf32> to vector<8x1024xf32>
    %179 = vector.shape_cast %176 : vector<8x1024xf32> to vector<1x8x1024xf32>
    tpu.vector_store %arg7[%c0_68, %c0_69, %c0_70], %179 {strides = array<i32>} : memref<1x8x1024xf32, #tpu.memory_space<vmem>>, vector<1x8x1024xf32>,
    return
  }
  func.func @transform_0(%arg0: i32) -> (i32, i32, i32, i32) {
    %c0_i32 = arith.constant 0 : i32
    %c0_i32_0 = arith.constant 0 : i32
    %c0_i32_1 = arith.constant 0 : i32
    %c0_i32_2 = arith.constant 0 : i32
    return %arg0, %c0_i32, %c0_i32_0, %c0_i32_1 : i32, i32, i32, i32
  }
  func.func @transform_1(%arg0: i32) -> (i32, i32, i32) {
    %c0_i32 = arith.constant 0 : i32
    %c0_i32_0 = arith.constant 0 : i32
    %c0_i32_1 = arith.constant 0 : i32
    return %arg0, %c0_i32, %c0_i32_0 : i32, i32, i32
  }
  func.func @transform_2(%arg0: i32) -> (i32, i32) {
    %c0_i32 = arith.constant 0 : i32
    %c0_i32_0 = arith.constant 0 : i32
    %c0_i32_1 = arith.constant 0 : i32
    return %c0_i32, %c0_i32_0 : i32, i32
  }
  func.func @transform_3(%arg0: i32) -> (i32, i32) {
    %c0_i32 = arith.constant 0 : i32
    %c0_i32_0 = arith.constant 0 : i32
    %c0_i32_1 = arith.constant 0 : i32
    return %c0_i32, %c0_i32_0 : i32, i32
  }
  func.func @transform_4(%arg0: i32) -> (i32, i32) {
    %c0_i32 = arith.constant 0 : i32
    %c0_i32_0 = arith.constant 0 : i32
    %c0_i32_1 = arith.constant 0 : i32
    return %c0_i32, %c0_i32_0 : i32, i32
  }
  func.func @transform_5(%arg0: i32) -> (i32, i32) {
    %c0_i32 = arith.constant 0 : i32
    %c0_i32_0 = arith.constant 0 : i32
    %c0_i32_1 = arith.constant 0 : i32
    return %c0_i32, %c0_i32_0 : i32, i32
  }
  func.func @transform_6(%arg0: i32) -> (i32, i32, i32) {
    %c0_i32 = arith.constant 0 : i32
    %c0_i32_0 = arith.constant 0 : i32
    %c0_i32_1 = arith.constant 0 : i32
    return %arg0, %c0_i32, %c0_i32_0 : i32, i32, i32
  }
}

</mosaic_0001>

<llo_original>
// kernel: upsample_conv_forward.1
$region0: #{upsample_conv_forward.1}
  #allocation0 [shape = 'u32[]', space=smem, size = 0x4, offset = 0x4, fixed_abs, tag = 'smem constant byte address 0x4 - core index']
  #allocation1 [shape = 'u32[144,128]{1,0:T(1,128)}', space=vmem, size = 0x12000, scoped, tag = 'internal scratch']
  #allocation2 [shape = 'f32[8,1090]{1,0:T(8,128)}', space=vmem, size = 0x9000, scoped, tag = 'scratch operand']
  %s0 = inlined_call_operand.vmem [shape: f32[2,4,16,16], index: 0, kind: input, shape index: {}]
  %s1 = inlined_call_operand.vmem [shape: f32[2,4,1024], index: 1, kind: input, shape index: {}]
  %s2 = inlined_call_operand.vmem [shape: bf16[32,16], index: 2, kind: input, shape index: {}, may-alias: {2,3}]
  %s3 = inlined_call_operand.vmem [shape: bf16[32,16], index: 3, kind: input, shape index: {}, may-alias: {2,3}]
  %s4 = inlined_call_operand.vmem [shape: bf16[8,72], index: 4, kind: input, shape index: {}]
  %s5 = inlined_call_operand.vmem [shape: f32[8,1], index: 5, kind: input, shape index: {}]
  %s6 = inlined_call_operand.vmem [shape: f32[2,8,1024], index: 6, kind: output, shape index: {}]
  %s7 = sld [smem:[#allocation0]]
  $region57: #{upsample_conv_forward.1} parent=0
    _
  %s9 = ssub.s32 1, %s7
  %s10 = scalar_select 0, %s9, %s7
  loop: start=0, step=1, limit=4
  $region2: #{upsample_conv_forward.1} parent=0 // loop_pre_header
    _
  $region3: #{upsample_conv_forward.1} parent=0 // loop_header
    %s12 = sphi 0, %s16
    %p13 = scmp.ge.s32.totalorder %s12, 4
    %s22 = sphi 0, %s24
    %s25 = sphi 0, %s22
    %s26 = sphi 0, %s25
    %s42 = sphi 0, %s26
    %s48 = sphi 0, %s50
    %s51 = sphi 0, %s48
    %s52 = sphi 0, %s51
    %s68 = sphi 0, %s52
    %s72 = sphi 0, %s72
    %s74 = sphi 0, %s72
    %s75 = sphi 0, %s74
    %s89 = sphi 0, %s75
    %s93 = sphi 0, %s93
    %s95 = sphi 0, %s93
    %s96 = sphi 0, %s95
    %s110 = sphi 0, %s96
    %s114 = sphi 0, %s114
    %s116 = sphi 0, %s114
    %s117 = sphi 0, %s116
    %s131 = sphi 0, %s117
    %s135 = sphi 0, %s135
    %s137 = sphi 0, %s135
    %s138 = sphi 0, %s137
    %s152 = sphi 0, %s138
    %s158 = sphi 0, %s160
    %s161 = sphi 0, %s158
    %s162 = sphi 0, %s161
    %s178 = sphi 0, %s162
  $region4: #{upsample_conv_forward.1} parent=0 // loop_header_branch
    %15 = sbr.rel (%p13) target = $region8
  $region5: #{upsample_conv_forward.1} parent=0 // loop_body
    %s17 = ssub.s32 %s12, 1
    %s18 = ssub.s32 %s12, 2
    %s19 = sadd.s32 %s12, 1
    %s20 = ssub.s32 %s12, %s19
    %p21 = scmp.eq.s32.totalorder %s20, 0
    %s23 = sadd.s32 %s22, 1
    %s24 = scalar_select %p21, %s22, %s23
    %p27 = pneg %p21
    %p28 = scmp.eq.s32.totalorder %s12, 1
    %p29 = por %p27, %p28
    %p30 = scmp.ne.s32.totalorder %s22, %s25
    %p31 = scmp.eq.s32.totalorder %s12, 0
    %p32 = por %p30, %p31
    %p33 = scmp.ne.s32.totalorder %s22, %s25
    %p34 = scmp.eq.s32.totalorder %s17, 1
    %p35 = por %p33, %p34
    %p36 = scmp.ne.s32.totalorder %s25, %s26
    %p37 = scmp.eq.s32.totalorder %s17, 0
    %p38 = por %p36, %p37
    %p39 = scmp.ne.s32.totalorder %s25, %s26
    %p40 = scmp.eq.s32.totalorder %s18, 1
    %p41 = por %p39, %p40
    %p43 = scmp.ne.s32.totalorder %s26, %s42
    %p44 = scmp.eq.s32.totalorder %s18, 0
    %p45 = por %p43, %p44
    %s46 = ssub.s32 %s12, %s19
    %p47 = scmp.eq.s32.totalorder %s46, 0
    %s49 = sadd.s32 %s48, 1
    %s50 = scalar_select %p47, %s48, %s49
    %p53 = pneg %p47
    %p54 = scmp.eq.s32.totalorder %s12, 1
    %p55 = por %p53, %p54
    %p56 = scmp.ne.s32.totalorder %s48, %s51
    %p57 = scmp.eq.s32.totalorder %s12, 0
    %p58 = por %p56, %p57
    %p59 = scmp.ne.s32.totalorder %s48, %s51
    %p60 = scmp.eq.s32.totalorder %s17, 1
    %p61 = por %p59, %p60
    %p62 = scmp.ne.s32.totalorder %s51, %s52
    %p63 = scmp.eq.s32.totalorder %s17, 0
    %p64 = por %p62, %p63
    %p65 = scmp.ne.s32.totalorder %s51, %s52
    %p66 = scmp.eq.s32.totalorder %s18, 1
    %p67 = por %p65, %p66
    %p69 = scmp.ne.s32.totalorder %s52, %s68
    %p70 = scmp.eq.s32.totalorder %s18, 0
    %p71 = por %p69, %p70
    %s73 = sadd.s32 %s72, 1
    %p76 = scmp.eq.s32.totalorder %s12, 1
    %p77 = scmp.ne.s32.totalorder %s72, %s74
    %p78 = scmp.eq.s32.totalorder %s12, 0
    %p79 = por %p77, %p78
    %p80 = scmp.ne.s32.totalorder %s72, %s74
    %p81 = scmp.eq.s32.totalorder %s17, 1
    %p82 = por %p80, %p81
    %p83 = scmp.ne.s32.totalorder %s74, %s75
    %p84 = scmp.eq.s32.totalorder %s17, 0
    %p85 = por %p83, %p84
    %p86 = scmp.ne.s32.totalorder %s74, %s75
    %p87 = scmp.eq.s32.totalorder %s18, 1
    %p88 = por %p86, %p87
    %p90 = scmp.ne.s32.totalorder %s75, %s89
    %p91 = scmp.eq.s32.totalorder %s18, 0
    %p92 = por %p90, %p91
    %s94 = sadd.s32 %s93, 1
    %p97 = scmp.eq.s32.totalorder %s12, 1
    %p98 = scmp.ne.s32.totalorder %s93, %s95
    %p99 = scmp.eq.s32.totalorder %s12, 0
    %p100 = por %p98, %p99
    %p101 = scmp.ne.s32.totalorder %s93, %s95
    %p102 = scmp.eq.s32.totalorder %s17, 1
    %p103 = por %p101, %p102
    %p104 = scmp.ne.s32.totalorder %s95, %s96
    %p105 = scmp.eq.s32.totalorder %s17, 0
    %p106 = por %p104, %p105
    %p107 = scmp.ne.s32.totalorder %s95, %s96
    %p108 = scmp.eq.s32.totalorder %s18, 1
    %p109 = por %p107, %p108
    %p111 = scmp.ne.s32.totalorder %s96, %s110
    %p112 = scmp.eq.s32.totalorder %s18, 0
    %p113 = por %p111, %p112
    %s115 = sadd.s32 %s114, 1
    %p118 = scmp.eq.s32.totalorder %s12, 1
    %p119 = scmp.ne.s32.totalorder %s114, %s116
    %p120 = scmp.eq.s32.totalorder %s12, 0
    %p121 = por %p119, %p120
    %p122 = scmp.ne.s32.totalorder %s114, %s116
    %p123 = scmp.eq.s32.totalorder %s17, 1
    %p124 = por %p122, %p123
    %p125 = scmp.ne.s32.totalorder %s116, %s117
    %p126 = scmp.eq.s32.totalorder %s17, 0
    %p127 = por %p125, %p126
    %p128 = scmp.ne.s32.totalorder %s116, %s117
    %p129 = scmp.eq.s32.totalorder %s18, 1
    %p130 = por %p128, %p129
    %p132 = scmp.ne.s32.totalorder %s117, %s131
    %p133 = scmp.eq.s32.totalorder %s18, 0
    %p134 = por %p132, %p133
    %s136 = sadd.s32 %s135, 1
    %p139 = scmp.eq.s32.totalorder %s12, 1
    %p140 = scmp.ne.s32.totalorder %s135, %s137
    %p141 = scmp.eq.s32.totalorder %s12, 0
    %p142 = por %p140, %p141
    %p143 = scmp.ne.s32.totalorder %s135, %s137
    %p144 = scmp.eq.s32.totalorder %s17, 1
    %p145 = por %p143, %p144
    %p146 = scmp.ne.s32.totalorder %s137, %s138
    %p147 = scmp.eq.s32.totalorder %s17, 0
    %p148 = por %p146, %p147
    %p149 = scmp.ne.s32.totalorder %s137, %s138
    %p150 = scmp.eq.s32.totalorder %s18, 1
    %p151 = por %p149, %p150
    %p153 = scmp.ne.s32.totalorder %s138, %s152
    %p154 = scmp.eq.s32.totalorder %s18, 0
    %p155 = por %p153, %p154
    %s156 = ssub.s32 %s12, %s19
    %p157 = scmp.eq.s32.totalorder %s156, 0
    %s159 = sadd.s32 %s158, 1
    %s160 = scalar_select %p157, %s158, %s159
    %p163 = pneg %p157
    %p164 = scmp.eq.s32.totalorder %s12, 1
    %p165 = por %p163, %p164
    %p166 = scmp.ne.s32.totalorder %s158, %s161
    %p167 = scmp.eq.s32.totalorder %s12, 0
    %p168 = por %p166, %p167
    %p169 = scmp.ne.s32.totalorder %s158, %s161
    %p170 = scmp.eq.s32.totalorder %s17, 1
    %p171 = por %p169, %p170
    %p172 = scmp.ne.s32.totalorder %s161, %s162
    %p173 = scmp.eq.s32.totalorder %s17, 0
    %p174 = por %p172, %p173
    %p175 = scmp.ne.s32.totalorder %s161, %s162
    %p176 = scmp.eq.s32.totalorder %s18, 1
    %p177 = por %p175, %p176
    %p179 = scmp.ne.s32.totalorder %s162, %s178
    %p180 = scmp.eq.s32.totalorder %s18, 0
    %p181 = por %p179, %p180
    %p182 = scmp.le.s32.totalorder 1, %s12
    %p183 = scmp.lt.s32.totalorder %s12, 3
    %p184 = pnand %p182, %p183
    %p185 = pneg %p184
    // Predicated region
    $region9: #{upsample_conv_forward.1} parent=5 // pred_check
      _
    $region10: #{upsample_conv_forward.1} parent=5 // pred_check_branch
      %187 = sbr.rel (%p184) target = $region12
    $region11: #{upsample_conv_forward.1} parent=5 // pred_region
      %s188 = ssub.s32 %s12, 1
      // Predicated region
      $region13: #{upsample_conv_forward.1} parent=11 // pred_check
        %p189 = pneg %p85
      $region14: #{upsample_conv_forward.1} parent=11 // pred_check_branch
        %191 = sbr.rel (%p189) target = $region16
      $region15: #{upsample_conv_forward.1} parent=11 // pred_region
        _
      $region16: #{upsample_conv_forward.1} parent=11 // pred_fallthru
        _
      // Predicated region
      $region17: #{upsample_conv_forward.1} parent=11 // pred_check
        %p192 = pneg %p106
      $region18: #{upsample_conv_forward.1} parent=11 // pred_check_branch
        %194 = sbr.rel (%p192) target = $region20
      $region19: #{upsample_conv_forward.1} parent=11 // pred_region
        _
      $region20: #{upsample_conv_forward.1} parent=11 // pred_fallthru
        _
      // Predicated region
      $region21: #{upsample_conv_forward.1} parent=11 // pred_check
        %p195 = pneg %p127
      $region22: #{upsample_conv_forward.1} parent=11 // pred_check_branch
        %197 = sbr.rel (%p195) target = $region24
      $region23: #{upsample_conv_forward.1} parent=11 // pred_region
        _
      $region24: #{upsample_conv_forward.1} parent=11 // pred_fallthru
        _
      // Predicated region
      $region25: #{upsample_conv_forward.1} parent=11 // pred_check
        %p198 = pneg %p148
      $region26: #{upsample_conv_forward.1} parent=11 // pred_check_branch
        %200 = sbr.rel (%p198) target = $region28
      $region27: #{upsample_conv_forward.1} parent=11 // pred_region
        _
      $region28: #{upsample_conv_forward.1} parent=11 // pred_fallthru
        _
    $region12: #{upsample_conv_forward.1} parent=5 // pred_fallthru
      _
    %p201 = scmp.lt.s32.totalorder %s12, 2
    // Predicated region
    $region29: #{upsample_conv_forward.1} parent=5 // pred_check
      %p202 = pneg %p201
    $region30: #{upsample_conv_forward.1} parent=5 // pred_check_branch
      %204 = sbr.rel (%p202) target = $region32
    $region31: #{upsample_conv_forward.1} parent=5 // pred_region
      // Predicated region
      $region33: #{upsample_conv_forward.1} parent=31 // pred_check
        %p205 = pneg %p32
      $region34: #{upsample_conv_forward.1} parent=31 // pred_check_branch
        %207 = sbr.rel (%p205) target = $region36
      $region35: #{upsample_conv_forward.1} parent=31 // pred_region
        %p208 = scmp.lt.s32.totalorder %s12, 1
        %s209 = scalar_select %p208, %s12, 1
        %s210 = smul.addr %s209, 8
        %s211 = smul.addr %s210, 8
        %s212 = scalar_lea.vmem %s0, %s211
      $region36: #{upsample_conv_forward.1} parent=31 // pred_fallthru
        _
      // Predicated region
      $region37: #{upsample_conv_forward.1} parent=31 // pred_check
        %p213 = pneg %p58
      $region38: #{upsample_conv_forward.1} parent=31 // pred_check_branch
        %215 = sbr.rel (%p213) target = $region40
      $region39: #{upsample_conv_forward.1} parent=31 // pred_region
        %p216 = scmp.lt.s32.totalorder %s12, 1
        %s217 = scalar_select %p216, %s12, 1
        %s218 = smul.addr %s217, 8
        %s219 = smul.addr %s218, 4
        %s220 = scalar_lea.vmem %s1, %s219
      $region40: #{upsample_conv_forward.1} parent=31 // pred_fallthru
        _
    $region32: #{upsample_conv_forward.1} parent=5 // pred_fallthru
      _
    %p221 = scmp.le.s32.totalorder 1, %s12
    %p222 = scmp.lt.s32.totalorder %s12, 3
    %p223 = pnand %p221, %p222
    %p224 = pneg %p223
    // Predicated region
    $region41: #{upsample_conv_forward.1} parent=5 // pred_check
      _
    $region42: #{upsample_conv_forward.1} parent=5 // pred_check_branch
      %226 = sbr.rel (%p223) target = $region44
    $region43: #{upsample_conv_forward.1} parent=5 // pred_region
      %s227 = ssub.s32 %s12, 1
      %p228 = scmp.lt.s32.totalorder %s17, 1
      %s229 = scalar_select %p228, %s17, 1
      %s230 = smul.addr %s229, 8
      %s231 = smul.addr %s230, 8
      %s232 = scalar_lea.vmem %s0, %s231
      %p233 = pneg %p38
      %p234 = pneg %p35
      %p235 = scmp.lt.s32.totalorder %s17, 1
      %s236 = scalar_select %p235, %s17, 1
      %s237 = smul.addr %s236, 8
      %s238 = smul.addr %s237, 4
      %s239 = scalar_lea.vmem %s1, %s238
      %p240 = pneg %p64
      %p241 = pneg %p61
      %p242 = pneg %p85
      %p243 = pneg %p82
      %p244 = pneg %p106
      %p245 = pneg %p103
      %p246 = pneg %p127
      %p247 = pneg %p124
      %p248 = pneg %p148
      %p249 = pneg %p145
      %p250 = pneg %p174
      %p251 = pneg %p171
      %p252 = scmp.lt.s32.totalorder %s17, 1
      %s253 = scalar_select %p252, %s17, 1
      %s254 = smul.addr %s253, 8
      %s255 = smul.addr %s254, 8
      %s256 = scalar_lea.vmem %s6, %s255
      %p257 = scmp.lt.s32.totalorder %s17, 1
      %s258 = scalar_select %p257, %s17, 1
      %s259 = smul.addr %s258, 8
      %s260 = smul.addr %s259, 8
      %s261 = scalar_lea.vmem %s0, %s260
      %p262 = scmp.lt.s32.totalorder %s17, 1
      %s263 = scalar_select %p262, %s17, 1
      %s264 = smul.addr %s263, 8
      %s265 = smul.addr %s264, 4
      %s266 = scalar_lea.vmem %s1, %s265
      %p267 = scmp.lt.s32.totalorder %s17, 1
      %s268 = scalar_select %p267, %s17, 1
      %s269 = smul.addr %s268, 8
      %s270 = smul.addr %s269, 8
      %s271 = scalar_lea.vmem %s6, %s270
      %273 = vst [vmem:[#allocation2] sm:$0xff] 0.0
      %274 = vst [vmem:[#allocation2 + $0x8] sm:$0xff] 0.0
      %275 = vst [vmem:[#allocation2 + $0x10] sm:$0xff] 0.0
      %276 = vst [vmem:[#allocation2 + $0x18] sm:$0xff] 0.0
      %277 = vst [vmem:[#allocation2 + $0x20] sm:$0xff] 0.0
      %278 = vst [vmem:[#allocation2 + $0x28] sm:$0xff] 0.0
      %279 = vst [vmem:[#allocation2 + $0x30] sm:$0xff] 0.0
      %280 = vst [vmem:[#allocation2 + $0x38] sm:$0xff] 0.0
      %vm281 = vcmask 539648
      %282 = vst.msk [vmem:[#allocation2 + $0x40] sm:$0xff] %vm281, 0.0
      %v283 = vld [vmem:[%s266] sm:$0xff]
      %v284 = vld [vmem:[%s266 + $0x8] sm:$0xff]
      %v285 = vld [vmem:[%s266 + $0x10] sm:$0xff]
      %v286 = vld [vmem:[%s266 + $0x18] sm:$0xff]
      %v291 = vcombine.high %v283, %v283
      %v292 = vcombine.high %v284, %v284
      %v293 = vcombine.high %v285, %v285
      %v294 = vcombine.high %v286, %v286
      %295 = vrot.lane.b32.xlu0 %v283, 33
      %v296 = vpop.permute.xlu0 %295
      %297 = vrot.lane.b32.xlu0 %v291, 33
      %v298 = vpop.permute.xlu0 %297
      %299 = vrot.lane.b32.xlu0 %v284, 33
      %v300 = vpop.permute.xlu0 %299
      %301 = vrot.lane.b32.xlu0 %v292, 33
      %v302 = vpop.permute.xlu0 %301
      %303 = vrot.lane.b32.xlu0 %v285, 33
      %v304 = vpop.permute.xlu0 %303
      %305 = vrot.lane.b32.xlu0 %v293, 33
      %v306 = vpop.permute.xlu0 %305
      %307 = vrot.lane.b32.xlu0 %v286, 33
      %v308 = vpop.permute.xlu0 %307
      %309 = vrot.lane.b32.xlu0 %v294, 33
      %v310 = vpop.permute.xlu0 %309
      %vm311 = vcmask 269312
      %v312 = vsel %vm311, %v296, %v298
      %v313 = vsel %vm311, %v298, %v300
      %v314 = vsel %vm311, %v300, %v302
      %v315 = vsel %vm311, %v302, %v304
      %v316 = vsel %vm311, %v304, %v306
      %v317 = vsel %vm311, %v306, %v308
      %v318 = vsel %vm311, %v308, %v310
      %vm328 = vcmask 1043720
      %329 = vst.msk [vmem:[#allocation2] sm:$0xf] %vm328, %v296
      %330 = vst [vmem:[#allocation2 + $0x8] sm:$0xf] %v312
      %331 = vst [vmem:[#allocation2 + $0x10] sm:$0xf] %v313
      %332 = vst [vmem:[#allocation2 + $0x18] sm:$0xf] %v314
      %333 = vst [vmem:[#allocation2 + $0x20] sm:$0xf] %v315
      %334 = vst [vmem:[#allocation2 + $0x28] sm:$0xf] %v316
      %335 = vst [vmem:[#allocation2 + $0x30] sm:$0xf] %v317
      %336 = vst [vmem:[#allocation2 + $0x38] sm:$0xf] %v318
      %vm337 = vcmask 265216
      %338 = vst.msk [vmem:[#allocation2 + $0x40] sm:$0xf] %vm337, %v310
      %v339 = vld [vmem:[%s261] sm:$0xff]
      %v340 = vld [vmem:[%s261 + $0x8] sm:$0xff]
      %v341 = vld [vmem:[%s261 + $0x10] sm:$0xff]
      %v342 = vld [vmem:[%s261 + $0x18] sm:$0xff]
      %v343 = vld [vmem:[%s261 + $0x20] sm:$0xff]
      %v344 = vld [vmem:[%s261 + $0x28] sm:$0xff]
      %v345 = vld [vmem:[%s261 + $0x30] sm:$0xff]
      %v346 = vld [vmem:[%s261 + $0x38] sm:$0xff]
      %v347 = vpack.c.bf16 %v340, %v339
      %v348 = vpack.c.bf16 %v342, %v341
      %v349 = vpack.c.bf16 %v344, %v343
      %v350 = vpack.c.bf16 %v346, %v345
      %v351 = vld [vmem:[%s3] sm:$0xf]
      %v352 = vld [vmem:[%s3 + $0x4] sm:$0xf]
      %v353 = vld [vmem:[%s3 + $0x8] sm:$0xf]
      %v354 = vld [vmem:[%s3 + $0xc] sm:$0xf]
      %v355 = vld [vmem:[%s2] sm:$0xf]
      %v356 = vld [vmem:[%s2 + $0x4] sm:$0xf]
      %v357 = vld [vmem:[%s2 + $0x8] sm:$0xf]
      %v358 = vld [vmem:[%s2 + $0xc] sm:$0xf]
      %v363 = vunpack.c.l.b16 %v351
      %v364 = vunpack.c.l.b16 %v352
      %v365 = vunpack.c.l.b16 %v353
      %v366 = vunpack.c.l.b16 %v354
      %v367 = vpack.c.b16 %v364, %v363
      %v368 = vpack.c.b16 %v366, %v365
      %vm369 = vcmask 130048
      %v371 = vsel %vm369, %v347, 0
      %v374 = vsel %vm369, %v367, 0
      %v377 = vsel %vm369, %v368, 0
      %379 = vmatprep.subr.bf16.mxu0 0
      %380 = vmatpush1.bf16.xpose.msra.mxu0 %v374
      %381 = vmatprep.subr.bf16.mxu0 0
      %382 = vmatpush1.bf16.xpose.msra.mxu0 %v377
      %383 = vmatprep.subr.bf16.mxu0 0
      %384 = vmatpush1.bf16.xpose.msra.mxu0 0
      %385 = vmatprep.subr.bf16.mxu0 0
      %386 = vmatpush1.bf16.xpose.msra.mxu0 0
      %387 = vmatprep.subr.bf16.mxu0 0
      %388 = vmatpush1.bf16.xpose.msra.mxu0 0
      %389 = vmatprep.subr.bf16.mxu0 0
      %390 = vmatpush1.bf16.xpose.msra.mxu0 0
      %391 = vmatprep.subr.bf16.mxu0 0
      %392 = vmatpush1.bf16.xpose.msra.mxu0 0
      %393 = vmatprep.subr.bf16.mxu0 0
      %394 = vmatpush1.bf16.xpose.msra.mxu0 0
      %395 = vmatprep.subr.bf16.mxu0 0
      %396 = vmatpush1.bf16.xpose.msra.mxu0 0
      %397 = vmatprep.subr.bf16.mxu0 0
      %398 = vmatpush1.bf16.xpose.msra.mxu0 0
      %399 = vmatprep.subr.bf16.mxu0 0
      %400 = vmatpush1.bf16.xpose.msra.mxu0 0
      %401 = vmatprep.subr.bf16.mxu0 0
      %402 = vmatpush1.bf16.xpose.msra.mxu0 0
      %403 = vmatprep.subr.bf16.mxu0 0
      %404 = vmatpush1.bf16.xpose.msra.mxu0 0
      %405 = vmatprep.subr.bf16.mxu0 0
      %406 = vmatpush1.bf16.xpose.msra.mxu0 0
      %407 = vmatprep.subr.bf16.mxu0 0
      %408 = vmatpush1.bf16.xpose.msra.mxu0 0
      %409 = vmatprep.subr.bf16.mxu0 0
      %410 = vmatpush1.bf16.xpose.msra.mxu0 0
      %411 = vmatprep.mubr.bf16.mxu0 0
      %412 = vmatmul.mubr.bf16.gmra.mrb[0].mxu0 %v371
      %v413 = vpop.f32.mrb[0].mxu0
      %v414 = vadd.f32 0.0, %v413
      %v415 = vpop.f32.mrb[0].mxu0
      %v416 = vpop.f32.mrb[0].mxu0
      %v417 = vadd.f32 0.0, %v416
      %v418 = vpop.f32.mrb[0].mxu0
      %419 = vdwg.mxu0
      %v421 = vsel %vm369, %v348, 0
      %423 = vmatprep.subr.bf16.mxu0 0
      %424 = vmatpush1.bf16.xpose.msra.mxu0 %v374
      %425 = vmatprep.subr.bf16.mxu0 0
      %426 = vmatpush1.bf16.xpose.msra.mxu0 %v377
      %427 = vmatprep.subr.bf16.mxu0 0
      %428 = vmatpush1.bf16.xpose.msra.mxu0 0
      %429 = vmatprep.subr.bf16.mxu0 0
      %430 = vmatpush1.bf16.xpose.msra.mxu0 0
      %431 = vmatprep.subr.bf16.mxu0 0
      %432 = vmatpush1.bf16.xpose.msra.mxu0 0
      %433 = vmatprep.subr.bf16.mxu0 0
      %434 = vmatpush1.bf16.xpose.msra.mxu0 0
      %435 = vmatprep.subr.bf16.mxu0 0
      %436 = vmatpush1.bf16.xpose.msra.mxu0 0
      %437 = vmatprep.subr.bf16.mxu0 0
      %438 = vmatpush1.bf16.xpose.msra.mxu0 0
      %439 = vmatprep.subr.bf16.mxu0 0
      %440 = vmatpush1.bf16.xpose.msra.mxu0 0
      %441 = vmatprep.subr.bf16.mxu0 0
      %442 = vmatpush1.bf16.xpose.msra.mxu0 0
      %443 = vmatprep.subr.bf16.mxu0 0
      %444 = vmatpush1.bf16.xpose.msra.mxu0 0
      %445 = vmatprep.subr.bf16.mxu0 0
      %446 = vmatpush1.bf16.xpose.msra.mxu0 0
      %447 = vmatprep.subr.bf16.mxu0 0
      %448 = vmatpush1.bf16.xpose.msra.mxu0 0
      %449 = vmatprep.subr.bf16.mxu0 0
      %450 = vmatpush1.bf16.xpose.msra.mxu0 0
      %451 = vmatprep.subr.bf16.mxu0 0
      %452 = vmatpush1.bf16.xpose.msra.mxu0 0
      %453 = vmatprep.subr.bf16.mxu0 0
      %454 = vmatpush1.bf16.xpose.msra.mxu0 0
      %455 = vmatprep.mubr.bf16.mxu0 0
      %456 = vmatmul.mubr.bf16.gmra.mrb[0].mxu0 %v421
      %v457 = vpop.f32.mrb[0].mxu0
      %v458 = vadd.f32 0.0, %v457
      %v459 = vpop.f32.mrb[0].mxu0
      %v460 = vpop.f32.mrb[0].mxu0
      %v461 = vadd.f32 0.0, %v460
      %v462 = vpop.f32.mrb[0].mxu0
      %463 = vdwg.mxu0
      %v465 = vsel %vm369, %v349, 0
      %467 = vmatprep.subr.bf16.mxu0 0
      %468 = vmatpush1.bf16.xpose.msra.mxu0 %v374
      %469 = vmatprep.subr.bf16.mxu0 0
      %470 = vmatpush1.bf16.xpose.msra.mxu0 %v377
      %471 = vmatprep.subr.bf16.mxu0 0
      %472 = vmatpush1.bf16.xpose.msra.mxu0 0
      %473 = vmatprep.subr.bf16.mxu0 0
      %474 = vmatpush1.bf16.xpose.msra.mxu0 0
      %475 = vmatprep.subr.bf16.mxu0 0
      %476 = vmatpush1.bf16.xpose.msra.mxu0 0
      %477 = vmatprep.subr.bf16.mxu0 0
      %478 = vmatpush1.bf16.xpose.msra.mxu0 0
      %479 = vmatprep.subr.bf16.mxu0 0
      %480 = vmatpush1.bf16.xpose.msra.mxu0 0
      %481 = vmatprep.subr.bf16.mxu0 0
      %482 = vmatpush1.bf16.xpose.msra.mxu0 0
      %483 = vmatprep.subr.bf16.mxu0 0
      %484 = vmatpush1.bf16.xpose.msra.mxu0 0
      %485 = vmatprep.subr.bf16.mxu0 0
      %486 = vmatpush1.bf16.xpose.msra.mxu0 0
      %487 = vmatprep.subr.bf16.mxu0 0
      %488 = vmatpush1.bf16.xpose.msra.mxu0 0
      %489 = vmatprep.subr.bf16.mxu0 0
      %490 = vmatpush1.bf16.xpose.msra.mxu0 0
      %491 = vmatprep.subr.bf16.mxu0 0
      %492 = vmatpush1.bf16.xpose.msra.mxu0 0
      %493 = vmatprep.subr.bf16.mxu0 0
      %494 = vmatpush1.bf16.xpose.msra.mxu0 0
      %495 = vmatprep.subr.bf16.mxu0 0
      %496 = vmatpush1.bf16.xpose.msra.mxu0 0
      %497 = vmatprep.subr.bf16.mxu0 0
      %498 = vmatpush1.bf16.xpose.msra.mxu0 0
      %499 = vmatprep.mubr.bf16.mxu0 0
      %500 = vmatmul.mubr.bf16.gmra.mrb[0].mxu0 %v465
      %v501 = vpop.f32.mrb[0].mxu0
      %v502 = vadd.f32 0.0, %v501
      %v503 = vpop.f32.mrb[0].mxu0
      %v504 = vpop.f32.mrb[0].mxu0
      %v505 = vadd.f32 0.0, %v504
      %v506 = vpop.f32.mrb[0].mxu0
      %507 = vdwg.mxu0
      %v509 = vsel %vm369, %v350, 0
      %511 = vmatprep.subr.bf16.mxu0 0
      %512 = vmatpush1.bf16.xpose.msra.mxu0 %v374
      %513 = vmatprep.subr.bf16.mxu0 0
      %514 = vmatpush1.bf16.xpose.msra.mxu0 %v377
      %515 = vmatprep.subr.bf16.mxu0 0
      %516 = vmatpush1.bf16.xpose.msra.mxu0 0
      %517 = vmatprep.subr.bf16.mxu0 0
      %518 = vmatpush1.bf16.xpose.msra.mxu0 0
      %519 = vmatprep.subr.bf16.mxu0 0
      %520 = vmatpush1.bf16.xpose.msra.mxu0 0
      %521 = vmatprep.subr.bf16.mxu0 0
      %522 = vmatpush1.bf16.xpose.msra.mxu0 0
      %523 = vmatprep.subr.bf16.mxu0 0
      %524 = vmatpush1.bf16.xpose.msra.mxu0 0
      %525 = vmatprep.subr.bf16.mxu0 0
      %526 = vmatpush1.bf16.xpose.msra.mxu0 0
      %527 = vmatprep.subr.bf16.mxu0 0
      %528 = vmatpush1.bf16.xpose.msra.mxu0 0
      %529 = vmatprep.subr.bf16.mxu0 0
      %530 = vmatpush1.bf16.xpose.msra.mxu0 0
      %531 = vmatprep.subr.bf16.mxu0 0
      %532 = vmatpush1.bf16.xpose.msra.mxu0 0
      %533 = vmatprep.subr.bf16.mxu0 0
      %534 = vmatpush1.bf16.xpose.msra.mxu0 0
      %535 = vmatprep.subr.bf16.mxu0 0
      %536 = vmatpush1.bf16.xpose.msra.mxu0 0
      %537 = vmatprep.subr.bf16.mxu0 0
      %538 = vmatpush1.bf16.xpose.msra.mxu0 0
      %539 = vmatprep.subr.bf16.mxu0 0
      %540 = vmatpush1.bf16.xpose.msra.mxu0 0
      %541 = vmatprep.subr.bf16.mxu0 0
      %542 = vmatpush1.bf16.xpose.msra.mxu0 0
      %543 = vmatprep.mubr.bf16.mxu0 0
      %544 = vmatmul.mubr.bf16.gmra.mrb[0].mxu0 %v509
      %v545 = vpop.f32.mrb[0].mxu0
      %v546 = vadd.f32 0.0, %v545
      %v547 = vpop.f32.mrb[0].mxu0
      %v548 = vpop.f32.mrb[0].mxu0
      %v549 = vadd.f32 0.0, %v548
      %v550 = vpop.f32.mrb[0].mxu0
      %551 = vdwg.mxu0
      %v552 = vpack.c.bf16 %v417, %v414
      %v553 = vpack.c.bf16 %v461, %v458
      %v554 = vpack.c.bf16 %v505, %v502
      %v555 = vpack.c.bf16 %v549, %v546
      %v560 = vunpack.c.l.b16 %v355
      %v561 = vunpack.c.l.b16 %v356
      %v562 = vunpack.c.l.b16 %v357
      %v563 = vunpack.c.l.b16 %v358
      %v564 = vpack.c.b16 %v561, %v560
      %v565 = vpack.c.b16 %v563, %v562
      %v567 = vsel %vm369, %v564, 0
      %v570 = vsel %vm369, %v565, 0
      %572 = vmatprep.subr.bf16.mxu0 0
      %573 = vmatpush1.bf16.msra.mxu0 %v552
      %574 = vmatprep.subr.bf16.mxu0 0
      %575 = vmatpush1.bf16.msra.mxu0 0
      %576 = vmatprep.subr.bf16.mxu0 0
      %577 = vmatpush1.bf16.msra.mxu0 0
      %578 = vmatprep.subr.bf16.mxu0 0
      %579 = vmatpush1.bf16.msra.mxu0 0
      %580 = vmatprep.subr.bf16.mxu0 0
      %581 = vmatpush1.bf16.msra.mxu0 0
      %582 = vmatprep.subr.bf16.mxu0 0
      %583 = vmatpush1.bf16.msra.mxu0 0
      %584 = vmatprep.subr.bf16.mxu0 0
      %585 = vmatpush1.bf16.msra.mxu0 0
      %586 = vmatprep.subr.bf16.mxu0 0
      %587 = vmatpush1.bf16.msra.mxu0 0
      %588 = vmatprep.subr.bf16.mxu0 0
      %589 = vmatpush1.bf16.msra.mxu0 0
      %590 = vmatprep.subr.bf16.mxu0 0
      %591 = vmatpush1.bf16.msra.mxu0 0
      %592 = vmatprep.subr.bf16.mxu0 0
      %593 = vmatpush1.bf16.msra.mxu0 0
      %594 = vmatprep.subr.bf16.mxu0 0
      %595 = vmatpush1.bf16.msra.mxu0 0
      %596 = vmatprep.subr.bf16.mxu0 0
      %597 = vmatpush1.bf16.msra.mxu0 0
      %598 = vmatprep.subr.bf16.mxu0 0
      %599 = vmatpush1.bf16.msra.mxu0 0
      %600 = vmatprep.subr.bf16.mxu0 0
      %601 = vmatpush1.bf16.msra.mxu0 0
      %602 = vmatprep.subr.bf16.mxu0 0
      %603 = vmatpush1.bf16.msra.mxu0 0
      %604 = vmatprep.mubr.bf16.mxu0 0
      %605 = vmatmul.mubr.bf16.gmra.mrb[0].mxu0 %v567
      %v606 = vpop.f32.mrb[0].mxu0
      %v607 = vadd.f32 0.0, %v606
      %v608 = vpop.f32.mrb[0].mxu0
      %v609 = vpop.f32.mrb[0].mxu0
      %v610 = vadd.f32 0.0, %v609
      %v611 = vpop.f32.mrb[0].mxu0
      %612 = vmatprep.mubr.bf16.mxu0 0
      %613 = vmatmul.mubr.bf16.gmra.mrb[0].mxu0 %v570
      %v614 = vpop.f32.mrb[0].mxu0
      %v615 = vadd.f32 0.0, %v614
      %v616 = vpop.f32.mrb[0].mxu0
      %v617 = vpop.f32.mrb[0].mxu0
      %v618 = vadd.f32 0.0, %v617
      %v619 = vpop.f32.mrb[0].mxu0
      %620 = vdwg.mxu0
      %621 = vmatprep.subr.bf16.mxu0 0
      %622 = vmatpush1.bf16.msra.mxu0 %v553
      %623 = vmatprep.subr.bf16.mxu0 0
      %624 = vmatpush1.bf16.msra.mxu0 0
      %625 = vmatprep.subr.bf16.mxu0 0
      %626 = vmatpush1.bf16.msra.mxu0 0
      %627 = vmatprep.subr.bf16.mxu0 0
      %628 = vmatpush1.bf16.msra.mxu0 0
      %629 = vmatprep.subr.bf16.mxu0 0
      %630 = vmatpush1.bf16.msra.mxu0 0
      %631 = vmatprep.subr.bf16.mxu0 0
      %632 = vmatpush1.bf16.msra.mxu0 0
      %633 = vmatprep.subr.bf16.mxu0 0
      %634 = vmatpush1.bf16.msra.mxu0 0
      %635 = vmatprep.subr.bf16.mxu0 0
      %636 = vmatpush1.bf16.msra.mxu0 0
      %637 = vmatprep.subr.bf16.mxu0 0
      %638 = vmatpush1.bf16.msra.mxu0 0
      %639 = vmatprep.subr.bf16.mxu0 0
      %640 = vmatpush1.bf16.msra.mxu0 0
      %641 = vmatprep.subr.bf16.mxu0 0
      %642 = vmatpush1.bf16.msra.mxu0 0
      %643 = vmatprep.subr.bf16.mxu0 0
      %644 = vmatpush1.bf16.msra.mxu0 0
      %645 = vmatprep.subr.bf16.mxu0 0
      %646 = vmatpush1.bf16.msra.mxu0 0
      %647 = vmatprep.subr.bf16.mxu0 0
      %648 = vmatpush1.bf16.msra.mxu0 0
      %649 = vmatprep.subr.bf16.mxu0 0
      %650 = vmatpush1.bf16.msra.mxu0 0
      %651 = vmatprep.subr.bf16.mxu0 0
      %652 = vmatpush1.bf16.msra.mxu0 0
      %653 = vmatprep.mubr.bf16.mxu0 0
      %654 = vmatmul.mubr.bf16.gmra.mrb[0].mxu0 %v567
      %v655 = vpop.f32.mrb[0].mxu0
      %v656 = vadd.f32 0.0, %v655
      %v657 = vpop.f32.mrb[0].mxu0
      %v658 = vpop.f32.mrb[0].mxu0
      %v659 = vadd.f32 0.0, %v658
      %v660 = vpop.f32.mrb[0].mxu0
      %661 = vmatprep.mubr.bf16.mxu0 0
      %662 = vmatmul.mubr.bf16.gmra.mrb[0].mxu0 %v570
      %v663 = vpop.f32.mrb[0].mxu0
      %v664 = vadd.f32 0.0, %v663
      %v665 = vpop.f32.mrb[0].mxu0
      %v666 = vpop.f32.mrb[0].mxu0
      %v667 = vadd.f32 0.0, %v666
      %v668 = vpop.f32.mrb[0].mxu0
      %669 = vdwg.mxu0
      %670 = vmatprep.subr.bf16.mxu0 0
      %671 = vmatpush1.bf16.msra.mxu0 %v554
      %672 = vmatprep.subr.bf16.mxu0 0
      %673 = vmatpush1.bf16.msra.mxu0 0
      %674 = vmatprep.subr.bf16.mxu0 0
      %675 = vmatpush1.bf16.msra.mxu0 0
      %676 = vmatprep.subr.bf16.mxu0 0
      %677 = vmatpush1.bf16.msra.mxu0 0
      %678 = vmatprep.subr.bf16.mxu0 0
      %679 = vmatpush1.bf16.msra.mxu0 0
      %680 = vmatprep.subr.bf16.mxu0 0
      %681 = vmatpush1.bf16.msra.mxu0 0
      %682 = vmatprep.subr.bf16.mxu0 0
      %683 = vmatpush1.bf16.msra.mxu0 0
      %684 = vmatprep.subr.bf16.mxu0 0
      %685 = vmatpush1.bf16.msra.mxu0 0
      %686 = vmatprep.subr.bf16.mxu0 0
      %687 = vmatpush1.bf16.msra.mxu0 0
      %688 = vmatprep.subr.bf16.mxu0 0
      %689 = vmatpush1.bf16.msra.mxu0 0
      %690 = vmatprep.subr.bf16.mxu0 0
      %691 = vmatpush1.bf16.msra.mxu0 0
      %692 = vmatprep.subr.bf16.mxu0 0
      %693 = vmatpush1.bf16.msra.mxu0 0
      %694 = vmatprep.subr.bf16.mxu0 0
      %695 = vmatpush1.bf16.msra.mxu0 0
      %696 = vmatprep.subr.bf16.mxu0 0
      %697 = vmatpush1.bf16.msra.mxu0 0
      %698 = vmatprep.subr.bf16.mxu0 0
      %699 = vmatpush1.bf16.msra.mxu0 0
      %700 = vmatprep.subr.bf16.mxu0 0
      %701 = vmatpush1.bf16.msra.mxu0 0
      %702 = vmatprep.mubr.bf16.mxu0 0
      %703 = vmatmul.mubr.bf16.gmra.mrb[0].mxu0 %v567
      %v704 = vpop.f32.mrb[0].mxu0
      %v705 = vadd.f32 0.0, %v704
      %v706 = vpop.f32.mrb[0].mxu0
      %v707 = vpop.f32.mrb[0].mxu0
      %v708 = vadd.f32 0.0, %v707
      %v709 = vpop.f32.mrb[0].mxu0
      %710 = vmatprep.mubr.bf16.mxu0 0
      %711 = vmatmul.mubr.bf16.gmra.mrb[0].mxu0 %v570
      %v712 = vpop.f32.mrb[0].mxu0
      %v713 = vadd.f32 0.0, %v712
      %v714 = vpop.f32.mrb[0].mxu0
      %v715 = vpop.f32.mrb[0].mxu0
      %v716 = vadd.f32 0.0, %v715
      %v717 = vpop.f32.mrb[0].mxu0
      %718 = vdwg.mxu0
      %719 = vmatprep.subr.bf16.mxu0 0
      %720 = vmatpush1.bf16.msra.mxu0 %v555
      %721 = vmatprep.subr.bf16.mxu0 0
      %722 = vmatpush1.bf16.msra.mxu0 0
      %723 = vmatprep.subr.bf16.mxu0 0
      %724 = vmatpush1.bf16.msra.mxu0 0
      %725 = vmatprep.subr.bf16.mxu0 0
      %726 = vmatpush1.bf16.msra.mxu0 0
      %727 = vmatprep.subr.bf16.mxu0 0
      %728 = vmatpush1.bf16.msra.mxu0 0
      %729 = vmatprep.subr.bf16.mxu0 0
      %730 = vmatpush1.bf16.msra.mxu0 0
      %731 = vmatprep.subr.bf16.mxu0 0
      %732 = vmatpush1.bf16.msra.mxu0 0
      %733 = vmatprep.subr.bf16.mxu0 0
      %734 = vmatpush1.bf16.msra.mxu0 0
      %735 = vmatprep.subr.bf16.mxu0 0
      %736 = vmatpush1.bf16.msra.mxu0 0
      %737 = vmatprep.subr.bf16.mxu0 0
      %738 = vmatpush1.bf16.msra.mxu0 0
      %739 = vmatprep.subr.bf16.mxu0 0
      %740 = vmatpush1.bf16.msra.mxu0 0
      %741 = vmatprep.subr.bf16.mxu0 0
      %742 = vmatpush1.bf16.msra.mxu0 0
      %743 = vmatprep.subr.bf16.mxu0 0
      %744 = vmatpush1.bf16.msra.mxu0 0
      %745 = vmatprep.subr.bf16.mxu0 0
      %746 = vmatpush1.bf16.msra.mxu0 0
      %747 = vmatprep.subr.bf16.mxu0 0
      %748 = vmatpush1.bf16.msra.mxu0 0
      %749 = vmatprep.subr.bf16.mxu0 0
      %750 = vmatpush1.bf16.msra.mxu0 0
      %751 = vmatprep.mubr.bf16.mxu0 0
      %752 = vmatmul.mubr.bf16.gmra.mrb[0].mxu0 %v567
      %v753 = vpop.f32.mrb[0].mxu0
      %v754 = vadd.f32 0.0, %v753
      %v755 = vpop.f32.mrb[0].mxu0
      %v756 = vpop.f32.mrb[0].mxu0
      %v757 = vadd.f32 0.0, %v756
      %v758 = vpop.f32.mrb[0].mxu0
      %759 = vmatprep.mubr.bf16.mxu0 0
      %760 = vmatmul.mubr.bf16.gmra.mrb[0].mxu0 %v570
      %v761 = vpop.f32.mrb[0].mxu0
      %v762 = vadd.f32 0.0, %v761
      %v763 = vpop.f32.mrb[0].mxu0
      %v764 = vpop.f32.mrb[0].mxu0
      %v765 = vadd.f32 0.0, %v764
      %v766 = vpop.f32.mrb[0].mxu0
      %767 = vdwg.mxu0
      %v772 = vrot.slane %v607, 4
      %v773 = vrot.slane %v656, 3
      %vm774 = vcmask 1045509
      %v775 = vsel %vm774, %v773, %v772
      %v776 = vrot.slane %v705, 2
      %vm777 = vcmask 1046534
      %v778 = vsel %vm777, %v776, %v775
      %v779 = vrot.slane %v754, 1
      %vm780 = vcmask 1047559
      %v781 = vsel %vm780, %v779, %v778
      %782 = vrot.lane.b32.xlu0 %v781, 33
      %v783 = vpop.permute.xlu0 %782
      %vm785 = vcmask 531724
      %786 = vst.msk [vmem:[#allocation2] sm:$0xf0] %vm785, %v783
      %v787 = vrot.slane %v607, 5
      %v788 = vrot.slane %v656, 4
      %v789 = vsel %vm774, %v788, %v787
      %v790 = vrot.slane %v705, 3
      %v791 = vsel %vm777, %v790, %v789
      %v792 = vrot.slane %v754, 2
      %v793 = vsel %vm780, %v792, %v791
      %794 = vrot.lane.b32.xlu0 %v793, 65
      %v795 = vpop.permute.xlu0 %794
      %vm797 = vcmask 794124
      %798 = vst.msk [vmem:[#allocation2] sm:$0xf0] %vm797, %v795
      %v799 = vrot.slane %v607, 6
      %v800 = vrot.slane %v656, 5
      %v801 = vsel %vm774, %v800, %v799
      %v802 = vrot.slane %v705, 4
      %v803 = vsel %vm777, %v802, %v801
      %v804 = vrot.slane %v754, 3
      %v805 = vsel %vm780, %v804, %v803
      %806 = vrot.lane.b32.xlu0 %v805, 97
      %v807 = vpop.permute.xlu0 %806
      %vm809 = vcmask 1048332
      %810 = vst.msk [vmem:[#allocation2] sm:$0xf0] %vm809, %v807
      %vm811 = vcmask 7172
      %812 = vst.msk [vmem:[#allocation2 + $0x8] sm:$0xf0] %vm811, %v807
      %v813 = vrot.slane %v607, 7
      %v814 = vrot.slane %v656, 6
      %v815 = vsel %vm774, %v814, %v813
      %v816 = vrot.slane %v705, 5
      %v817 = vsel %vm777, %v816, %v815
      %v818 = vrot.slane %v754, 4
      %v819 = vsel %vm780, %v818, %v817
      %820 = vrot.lane.b32.xlu0 %v819, 1
      %v821 = vpop.permute.xlu0 %820
      %vm823 = vcmask 269324
      %824 = vst.msk [vmem:[#allocation2 + $0x8] sm:$0xf0] %vm823, %v821
      %v825 = vrot.slane %v656, 7
      %v826 = vsel %vm774, %v825, %v607
      %v827 = vrot.slane %v705, 6
      %v828 = vsel %vm777, %v827, %v826
      %v829 = vrot.slane %v754, 5
      %v830 = vsel %vm780, %v829, %v828
      %831 = vrot.lane.b32.xlu0 %v830, 33
      %v832 = vpop.permute.xlu0 %831
      %834 = vst.msk [vmem:[#allocation2 + $0x8] sm:$0xf0] %vm785, %v832
      %v835 = vrot.slane %v607, 1
      %v836 = vsel %vm774, %v656, %v835
      %v837 = vrot.slane %v705, 7
      %v838 = vsel %vm777, %v837, %v836
      %v839 = vrot.slane %v754, 6
      %v840 = vsel %vm780, %v839, %v838
      %841 = vrot.lane.b32.xlu0 %v840, 65
      %v842 = vpop.permute.xlu0 %841
      %844 = vst.msk [vmem:[#allocation2 + $0x8] sm:$0xf0] %vm797, %v842
      %v845 = vrot.slane %v607, 2
      %v846 = vrot.slane %v656, 1
      %v847 = vsel %vm774, %v846, %v845
      %v848 = vsel %vm777, %v705, %v847
      %v849 = vrot.slane %v754, 7
      %v850 = vsel %vm780, %v849, %v848
      %851 = vrot.lane.b32.xlu0 %v850, 97
      %v852 = vpop.permute.xlu0 %851
      %854 = vst.msk [vmem:[#allocation2 + $0x8] sm:$0xf0] %vm809, %v852
      %855 = vst.msk [vmem:[#allocation2 + $0x10] sm:$0xf0] %vm811, %v852
      %v856 = vrot.slane %v607, 3
      %v857 = vrot.slane %v656, 2
      %v858 = vsel %vm774, %v857, %v856
      %v859 = vrot.slane %v705, 1
      %v860 = vsel %vm777, %v859, %v858
      %v861 = vsel %vm780, %v754, %v860
      %862 = vrot.lane.b32.xlu0 %v861, 1
      %v863 = vpop.permute.xlu0 %862
      %865 = vst.msk [vmem:[#allocation2 + $0x10] sm:$0xf0] %vm823, %v863
      %v870 = vrot.slane %v610, 4
      %v871 = vrot.slane %v659, 3
      %v872 = vsel %vm774, %v871, %v870
      %v873 = vrot.slane %v708, 2
      %v874 = vsel %vm777, %v873, %v872
      %v875 = vrot.slane %v757, 1
      %v876 = vsel %vm780, %v875, %v874
      %877 = vrot.lane.b32.xlu0 %v876, 33
      %v878 = vpop.permute.xlu0 %877
      %880 = vst.msk [vmem:[#allocation2 + $0x10] sm:$0xf0] %vm785, %v878
      %v881 = vrot.slane %v610, 5
      %v882 = vrot.slane %v659, 4
      %v883 = vsel %vm774, %v882, %v881
      %v884 = vrot.slane %v708, 3
      %v885 = vsel %vm777, %v884, %v883
      %v886 = vrot.slane %v757, 2
      %v887 = vsel %vm780, %v886, %v885
      %888 = vrot.lane.b32.xlu0 %v887, 65
      %v889 = vpop.permute.xlu0 %888
      %891 = vst.msk [vmem:[#allocation2 + $0x10] sm:$0xf0] %vm797, %v889
      %v892 = vrot.slane %v610, 6
      %v893 = vrot.slane %v659, 5
      %v894 = vsel %vm774, %v893, %v892
      %v895 = vrot.slane %v708, 4
      %v896 = vsel %vm777, %v895, %v894
      %v897 = vrot.slane %v757, 3
      %v898 = vsel %vm780, %v897, %v896
      %899 = vrot.lane.b32.xlu0 %v898, 97
      %v900 = vpop.permute.xlu0 %899
      %902 = vst.msk [vmem:[#allocation2 + $0x10] sm:$0xf0] %vm809, %v900
      %903 = vst.msk [vmem:[#allocation2 + $0x18] sm:$0xf0] %vm811, %v900
      %v904 = vrot.slane %v610, 7
      %v905 = vrot.slane %v659, 6
      %v906 = vsel %vm774, %v905, %v904
      %v907 = vrot.slane %v708, 5
      %v908 = vsel %vm777, %v907, %v906
      %v909 = vrot.slane %v757, 4
      %v910 = vsel %vm780, %v909, %v908
      %911 = vrot.lane.b32.xlu0 %v910, 1
      %v912 = vpop.permute.xlu0 %911
      %914 = vst.msk [vmem:[#allocation2 + $0x18] sm:$0xf0] %vm823, %v912
      %v915 = vrot.slane %v659, 7
      %v916 = vsel %vm774, %v915, %v610
      %v917 = vrot.slane %v708, 6
      %v918 = vsel %vm777, %v917, %v916
      %v919 = vrot.slane %v757, 5
      %v920 = vsel %vm780, %v919, %v918
      %921 = vrot.lane.b32.xlu0 %v920, 33
      %v922 = vpop.permute.xlu0 %921
      %924 = vst.msk [vmem:[#allocation2 + $0x18] sm:$0xf0] %vm785, %v922
      %v925 = vrot.slane %v610, 1
      %v926 = vsel %vm774, %v659, %v925
      %v927 = vrot.slane %v708, 7
      %v928 = vsel %vm777, %v927, %v926
      %v929 = vrot.slane %v757, 6
      %v930 = vsel %vm780, %v929, %v928
      %931 = vrot.lane.b32.xlu0 %v930, 65
      %v932 = vpop.permute.xlu0 %931
      %934 = vst.msk [vmem:[#allocation2 + $0x18] sm:$0xf0] %vm797, %v932
      %v935 = vrot.slane %v610, 2
      %v936 = vrot.slane %v659, 1
      %v937 = vsel %vm774, %v936, %v935
      %v938 = vsel %vm777, %v708, %v937
      %v939 = vrot.slane %v757, 7
      %v940 = vsel %vm780, %v939, %v938
      %941 = vrot.lane.b32.xlu0 %v940, 97
      %v942 = vpop.permute.xlu0 %941
      %944 = vst.msk [vmem:[#allocation2 + $0x18] sm:$0xf0] %vm809, %v942
      %945 = vst.msk [vmem:[#allocation2 + $0x20] sm:$0xf0] %vm811, %v942
      %v946 = vrot.slane %v610, 3
      %v947 = vrot.slane %v659, 2
      %v948 = vsel %vm774, %v947, %v946
      %v949 = vrot.slane %v708, 1
      %v950 = vsel %vm777, %v949, %v948
      %v951 = vsel %vm780, %v757, %v950
      %952 = vrot.lane.b32.xlu0 %v951, 1
      %v953 = vpop.permute.xlu0 %952
      %955 = vst.msk [vmem:[#allocation2 + $0x20] sm:$0xf0] %vm823, %v953
      %v960 = vrot.slane %v615, 4
      %v961 = vrot.slane %v664, 3
      %v962 = vsel %vm774, %v961, %v960
      %v963 = vrot.slane %v713, 2
      %v964 = vsel %vm777, %v963, %v962
      %v965 = vrot.slane %v762, 1
      %v966 = vsel %vm780, %v965, %v964
      %967 = vrot.lane.b32.xlu0 %v966, 33
      %v968 = vpop.permute.xlu0 %967
      %970 = vst.msk [vmem:[#allocation2 + $0x20] sm:$0xf0] %vm785, %v968
      %v971 = vrot.slane %v615, 5
      %v972 = vrot.slane %v664, 4
      %v973 = vsel %vm774, %v972, %v971
      %v974 = vrot.slane %v713, 3
      %v975 = vsel %vm777, %v974, %v973
      %v976 = vrot.slane %v762, 2
      %v977 = vsel %vm780, %v976, %v975
      %978 = vrot.lane.b32.xlu0 %v977, 65
      %v979 = vpop.permute.xlu0 %978
      %981 = vst.msk [vmem:[#allocation2 + $0x20] sm:$0xf0] %vm797, %v979
      %v982 = vrot.slane %v615, 6
      %v983 = vrot.slane %v664, 5
      %v984 = vsel %vm774, %v983, %v982
      %v985 = vrot.slane %v713, 4
      %v986 = vsel %vm777, %v985, %v984
      %v987 = vrot.slane %v762, 3
      %v988 = vsel %vm780, %v987, %v986
      %989 = vrot.lane.b32.xlu0 %v988, 97
      %v990 = vpop.permute.xlu0 %989
      %992 = vst.msk [vmem:[#allocation2 + $0x20] sm:$0xf0] %vm809, %v990
      %993 = vst.msk [vmem:[#allocation2 + $0x28] sm:$0xf0] %vm811, %v990
      %v994 = vrot.slane %v615, 7
      %v995 = vrot.slane %v664, 6
      %v996 = vsel %vm774, %v995, %v994
      %v997 = vrot.slane %v713, 5
      %v998 = vsel %vm777, %v997, %v996
      %v999 = vrot.slane %v762, 4
      %v1000 = vsel %vm780, %v999, %v998
      %1001 = vrot.lane.b32.xlu0 %v1000, 1
      %v1002 = vpop.permute.xlu0 %1001
      %1004 = vst.msk [vmem:[#allocation2 + $0x28] sm:$0xf0] %vm823, %v1002
      %v1005 = vrot.slane %v664, 7
      %v1006 = vsel %vm774, %v1005, %v615
      %v1007 = vrot.slane %v713, 6
      %v1008 = vsel %vm777, %v1007, %v1006
      %v1009 = vrot.slane %v762, 5
      %v1010 = vsel %vm780, %v1009, %v1008
      %1011 = vrot.lane.b32.xlu0 %v1010, 33
      %v1012 = vpop.permute.xlu0 %1011
      %1014 = vst.msk [vmem:[#allocation2 + $0x28] sm:$0xf0] %vm785, %v1012
      %v1015 = vrot.slane %v615, 1
      %v1016 = vsel %vm774, %v664, %v1015
      %v1017 = vrot.slane %v713, 7
      %v1018 = vsel %vm777, %v1017, %v1016
      %v1019 = vrot.slane %v762, 6
      %v1020 = vsel %vm780, %v1019, %v1018
      %1021 = vrot.lane.b32.xlu0 %v1020, 65
      %v1022 = vpop.permute.xlu0 %1021
      %1024 = vst.msk [vmem:[#allocation2 + $0x28] sm:$0xf0] %vm797, %v1022
      %v1025 = vrot.slane %v615, 2
      %v1026 = vrot.slane %v664, 1
      %v1027 = vsel %vm774, %v1026, %v1025
      %v1028 = vsel %vm777, %v713, %v1027
      %v1029 = vrot.slane %v762, 7
      %v1030 = vsel %vm780, %v1029, %v1028
      %1031 = vrot.lane.b32.xlu0 %v1030, 97
      %v1032 = vpop.permute.xlu0 %1031
      %1034 = vst.msk [vmem:[#allocation2 + $0x28] sm:$0xf0] %vm809, %v1032
      %1035 = vst.msk [vmem:[#allocation2 + $0x30] sm:$0xf0] %vm811, %v1032
      %v1036 = vrot.slane %v615, 3
      %v1037 = vrot.slane %v664, 2
      %v1038 = vsel %vm774, %v1037, %v1036
      %v1039 = vrot.slane %v713, 1
      %v1040 = vsel %vm777, %v1039, %v1038
      %v1041 = vsel %vm780, %v762, %v1040
      %1042 = vrot.lane.b32.xlu0 %v1041, 1
      %v1043 = vpop.permute.xlu0 %1042
      %1045 = vst.msk [vmem:[#allocation2 + $0x30] sm:$0xf0] %vm823, %v1043
      %v1050 = vrot.slane %v618, 4
      %v1051 = vrot.slane %v667, 3
      %v1052 = vsel %vm774, %v1051, %v1050
      %v1053 = vrot.slane %v716, 2
      %v1054 = vsel %vm777, %v1053, %v1052
      %v1055 = vrot.slane %v765, 1
      %v1056 = vsel %vm780, %v1055, %v1054
      %1057 = vrot.lane.b32.xlu0 %v1056, 33
      %v1058 = vpop.permute.xlu0 %1057
      %1060 = vst.msk [vmem:[#allocation2 + $0x30] sm:$0xf0] %vm785, %v1058
      %v1061 = vrot.slane %v618, 5
      %v1062 = vrot.slane %v667, 4
      %v1063 = vsel %vm774, %v1062, %v1061
      %v1064 = vrot.slane %v716, 3
      %v1065 = vsel %vm777, %v1064, %v1063
      %v1066 = vrot.slane %v765, 2
      %v1067 = vsel %vm780, %v1066, %v1065
      %1068 = vrot.lane.b32.xlu0 %v1067, 65
      %v1069 = vpop.permute.xlu0 %1068
      %1071 = vst.msk [vmem:[#allocation2 + $0x30] sm:$0xf0] %vm797, %v1069
      %v1072 = vrot.slane %v618, 6
      %v1073 = vrot.slane %v667, 5
      %v1074 = vsel %vm774, %v1073, %v1072
      %v1075 = vrot.slane %v716, 4
      %v1076 = vsel %vm777, %v1075, %v1074
      %v1077 = vrot.slane %v765, 3
      %v1078 = vsel %vm780, %v1077, %v1076
      %1079 = vrot.lane.b32.xlu0 %v1078, 97
      %v1080 = vpop.permute.xlu0 %1079
      %1082 = vst.msk [vmem:[#allocation2 + $0x30] sm:$0xf0] %vm809, %v1080
      %1083 = vst.msk [vmem:[#allocation2 + $0x38] sm:$0xf0] %vm811, %v1080
      %v1084 = vrot.slane %v618, 7
      %v1085 = vrot.slane %v667, 6
      %v1086 = vsel %vm774, %v1085, %v1084
      %v1087 = vrot.slane %v716, 5
      %v1088 = vsel %vm777, %v1087, %v1086
      %v1089 = vrot.slane %v765, 4
      %v1090 = vsel %vm780, %v1089, %v1088
      %1091 = vrot.lane.b32.xlu0 %v1090, 1
      %v1092 = vpop.permute.xlu0 %1091
      %1094 = vst.msk [vmem:[#allocation2 + $0x38] sm:$0xf0] %vm823, %v1092
      %v1095 = vrot.slane %v667, 7
      %v1096 = vsel %vm774, %v1095, %v618
      %v1097 = vrot.slane %v716, 6
      %v1098 = vsel %vm777, %v1097, %v1096
      %v1099 = vrot.slane %v765, 5
      %v1100 = vsel %vm780, %v1099, %v1098
      %1101 = vrot.lane.b32.xlu0 %v1100, 33
      %v1102 = vpop.permute.xlu0 %1101
      %1104 = vst.msk [vmem:[#allocation2 + $0x38] sm:$0xf0] %vm785, %v1102
      %v1105 = vrot.slane %v618, 1
      %v1106 = vsel %vm774, %v667, %v1105
      %v1107 = vrot.slane %v716, 7
      %v1108 = vsel %vm777, %v1107, %v1106
      %v1109 = vrot.slane %v765, 6
      %v1110 = vsel %vm780, %v1109, %v1108
      %1111 = vrot.lane.b32.xlu0 %v1110, 65
      %v1112 = vpop.permute.xlu0 %1111
      %1114 = vst.msk [vmem:[#allocation2 + $0x38] sm:$0xf0] %vm797, %v1112
      %v1115 = vrot.slane %v618, 2
      %v1116 = vrot.slane %v667, 1
      %v1117 = vsel %vm774, %v1116, %v1115
      %v1118 = vsel %vm777, %v716, %v1117
      %v1119 = vrot.slane %v765, 7
      %v1120 = vsel %vm780, %v1119, %v1118
      %1121 = vrot.lane.b32.xlu0 %v1120, 97
      %v1122 = vpop.permute.xlu0 %1121
      %1124 = vst.msk [vmem:[#allocation2 + $0x38] sm:$0xf0] %vm809, %v1122
      %1125 = vst.msk [vmem:[#allocation2 + $0x40] sm:$0xf0] %vm811, %v1122
      %v1126 = vrot.slane %v618, 3
      %v1127 = vrot.slane %v667, 2
      %v1128 = vsel %vm774, %v1127, %v1126
      %v1129 = vrot.slane %v716, 1
      %v1130 = vsel %vm777, %v1129, %v1128
      %v1131 = vsel %vm780, %v765, %v1130
      %1132 = vrot.lane.b32.xlu0 %v1131, 1
      %v1133 = vpop.permute.xlu0 %1132
      %1135 = vst.msk [vmem:[#allocation2 + $0x40] sm:$0xf0] %vm823, %v1133
      %v1136 = vlaneseq
      %v1137 = vand.u32 %v1136, 127
      %v1138 = vadd.s32 %v1137, 128
      %v1139 = vadd.s32 %v1137, 256
      %v1140 = vadd.s32 %v1137, 384
      %v1141 = vadd.s32 %v1137, 512
      %v1142 = vadd.s32 %v1137, 640
      %v1143 = vadd.s32 %v1137, 768
      %v1144 = vadd.s32 %v1137, 896
      %v1145 = vadd.s32 %v1137, 1024
      %v1146 = vld [vmem:[#allocation2] sm:$0xff]
      %v1147 = vld [vmem:[#allocation2 + $0x8] sm:$0xff]
      %v1148 = vld [vmem:[#allocation2 + $0x10] sm:$0xff]
      %v1149 = vld [vmem:[#allocation2 + $0x18] sm:$0xff]
      %v1150 = vld [vmem:[#allocation2 + $0x20] sm:$0xff]
      %v1151 = vld [vmem:[#allocation2 + $0x28] sm:$0xff]
      %v1152 = vld [vmem:[#allocation2 + $0x30] sm:$0xff]
      %v1153 = vld [vmem:[#allocation2 + $0x38] sm:$0xff]
      %v1154 = vld [vmem:[#allocation2 + $0x40] sm:$0xff]
      %vm1155 = vcmp.lt.s32.totalorder %v1137, 0
      %v1156 = vsub.s32 0, %v1137
      %v1157 = vsel %vm1155, %v1156, %v1137
      %v1158 = vshrl.u32 %v1157, 5
      %v1159 = vand.u32 %v1157, 31
      %v1160 = vsub.s32 0, %v1159
      %v1161 = vsel %vm1155, %v1160, %v1159
      %vm1162 = vcmp.lt.s32.totalorder %v1138, 0
      %v1163 = vsub.s32 0, %v1138
      %v1164 = vsel %vm1162, %v1163, %v1138
      %v1165 = vshrl.u32 %v1164, 5
      %v1166 = vand.u32 %v1164, 31
      %v1167 = vsub.s32 0, %v1166
      %v1168 = vsel %vm1162, %v1167, %v1166
      %vm1169 = vcmp.lt.s32.totalorder %v1139, 0
      %v1170 = vsub.s32 0, %v1139
      %v1171 = vsel %vm1169, %v1170, %v1139
      %v1172 = vshrl.u32 %v1171, 5
      %v1173 = vand.u32 %v1171, 31
      %v1174 = vsub.s32 0, %v1173
      %v1175 = vsel %vm1169, %v1174, %v1173
      %vm1176 = vcmp.lt.s32.totalorder %v1140, 0
      %v1177 = vsub.s32 0, %v1140
      %v1178 = vsel %vm1176, %v1177, %v1140
      %v1179 = vshrl.u32 %v1178, 5
      %v1180 = vand.u32 %v1178, 31
      %v1181 = vsub.s32 0, %v1180
      %v1182 = vsel %vm1176, %v1181, %v1180
      %vm1183 = vcmp.lt.s32.totalorder %v1141, 0
      %v1184 = vsub.s32 0, %v1141
      %v1185 = vsel %vm1183, %v1184, %v1141
      %v1186 = vshrl.u32 %v1185, 5
      %v1187 = vand.u32 %v1185, 31
      %v1188 = vsub.s32 0, %v1187
      %v1189 = vsel %vm1183, %v1188, %v1187
      %vm1190 = vcmp.lt.s32.totalorder %v1142, 0
      %v1191 = vsub.s32 0, %v1142
      %v1192 = vsel %vm1190, %v1191, %v1142
      %v1193 = vshrl.u32 %v1192, 5
      %v1194 = vand.u32 %v1192, 31
      %v1195 = vsub.s32 0, %v1194
      %v1196 = vsel %vm1190, %v1195, %v1194
      %vm1197 = vcmp.lt.s32.totalorder %v1143, 0
      %v1198 = vsub.s32 0, %v1143
      %v1199 = vsel %vm1197, %v1198, %v1143
      %v1200 = vshrl.u32 %v1199, 5
      %v1201 = vand.u32 %v1199, 31
      %v1202 = vsub.s32 0, %v1201
      %v1203 = vsel %vm1197, %v1202, %v1201
      %vm1204 = vcmp.lt.s32.totalorder %v1144, 0
      %v1205 = vsub.s32 0, %v1144
      %v1206 = vsel %vm1204, %v1205, %v1144
      %v1207 = vshrl.u32 %v1206, 5
      %v1208 = vand.u32 %v1206, 31
      %v1209 = vsub.s32 0, %v1208
      %v1210 = vsel %vm1204, %v1209, %v1208
      %vm1211 = vcmp.lt.s32.totalorder %v1145, 0
      %v1212 = vsub.s32 0, %v1145
      %v1213 = vsel %vm1211, %v1212, %v1145
      %v1214 = vshrl.u32 %v1213, 5
      %v1215 = vand.u32 %v1213, 31
      %v1216 = vsub.s32 0, %v1215
      %v1217 = vsel %vm1211, %v1216, %v1215
      %vm1218 = vcmp.ne.s32.totalorder %v1161, 0
      %vm1219 = vcmp.ne.s32.totalorder %v1168, 0
      %vm1220 = vcmp.ne.s32.totalorder %v1175, 0
      %vm1221 = vcmp.ne.s32.totalorder %v1182, 0
      %vm1222 = vcmp.ne.s32.totalorder %v1189, 0
      %vm1223 = vcmp.ne.s32.totalorder %v1196, 0
      %vm1224 = vcmp.ne.s32.totalorder %v1203, 0
      %vm1225 = vcmp.ne.s32.totalorder %v1210, 0
      %vm1226 = vcmp.ne.s32.totalorder %v1217, 0
      %vm1227 = vcmp.lt.s32.totalorder %v1161, 0
      %vm1228 = vcmp.lt.s32.totalorder %v1168, 0
      %vm1229 = vcmp.lt.s32.totalorder %v1175, 0
      %vm1230 = vcmp.lt.s32.totalorder %v1182, 0
      %vm1231 = vcmp.lt.s32.totalorder %v1189, 0
      %vm1232 = vcmp.lt.s32.totalorder %v1196, 0
      %vm1233 = vcmp.lt.s32.totalorder %v1203, 0
      %vm1234 = vcmp.lt.s32.totalorder %v1210, 0
      %vm1235 = vcmp.lt.s32.totalorder %v1217, 0
      %vm1236 = vmand %vm1227, %vm1218
      %vm1237 = vmand %vm1228, %vm1219
      %vm1238 = vmand %vm1229, %vm1220
      %vm1239 = vmand %vm1230, %vm1221
      %vm1240 = vmand %vm1231, %vm1222
      %vm1241 = vmand %vm1232, %vm1223
      %vm1242 = vmand %vm1233, %vm1224
      %vm1243 = vmand %vm1234, %vm1225
      %vm1244 = vmand %vm1235, %vm1226
      %v1245 = vadd.s32 %v1161, 32
      %v1246 = vadd.s32 %v1168, 32
      %v1247 = vadd.s32 %v1175, 32
      %v1248 = vadd.s32 %v1182, 32
      %v1249 = vadd.s32 %v1189, 32
      %v1250 = vadd.s32 %v1196, 32
      %v1251 = vadd.s32 %v1203, 32
      %v1252 = vadd.s32 %v1210, 32
      %v1253 = vadd.s32 %v1217, 32
      %v1254 = vsel %vm1236, %v1245, %v1161
      %v1255 = vsel %vm1237, %v1246, %v1168
      %v1256 = vsel %vm1238, %v1247, %v1175
      %v1257 = vsel %vm1239, %v1248, %v1182
      %v1258 = vsel %vm1240, %v1249, %v1189
      %v1259 = vsel %vm1241, %v1250, %v1196
      %v1260 = vsel %vm1242, %v1251, %v1203
      %v1261 = vsel %vm1243, %v1252, %v1210
      %v1262 = vsel %vm1244, %v1253, %v1217
      %vm1263 = vcmp.eq.s32.totalorder %v1254, 0
      %vm1264 = vcmp.eq.s32.totalorder %v1255, 0
      %vm1265 = vcmp.eq.s32.totalorder %v1256, 0
      %vm1266 = vcmp.eq.s32.totalorder %v1257, 0
      %vm1267 = vcmp.eq.s32.totalorder %v1258, 0
      %vm1268 = vcmp.eq.s32.totalorder %v1259, 0
      %vm1269 = vcmp.eq.s32.totalorder %v1260, 0
      %vm1270 = vcmp.eq.s32.totalorder %v1261, 0
      %vm1271 = vcmp.eq.s32.totalorder %v1262, 0
      %v1272 = vsel %vm1263, 1, 0
      %v1273 = vsel %vm1264, 1, 0
      %v1274 = vsel %vm1265, 1, 0
      %v1275 = vsel %vm1266, 1, 0
      %v1276 = vsel %vm1267, 1, 0
      %v1277 = vsel %vm1268, 1, 0
      %v1278 = vsel %vm1269, 1, 0
      %v1279 = vsel %vm1270, 1, 0
      %v1280 = vsel %vm1271, 1, 0
      %vm1281 = vcmp.eq.s32.totalorder %v1272, 1
      %vm1282 = vcmp.eq.s32.totalorder %v1273, 1
      %vm1283 = vcmp.eq.s32.totalorder %v1274, 1
      %vm1284 = vcmp.eq.s32.totalorder %v1275, 1
      %vm1285 = vcmp.eq.s32.totalorder %v1276, 1
      %vm1286 = vcmp.eq.s32.totalorder %v1277, 1
      %vm1287 = vcmp.eq.s32.totalorder %v1278, 1
      %vm1288 = vcmp.eq.s32.totalorder %v1279, 1
      %vm1289 = vcmp.eq.s32.totalorder %v1280, 1
      %v1290 = vsel %vm1281, 0.0, %v1146
      %v1291 = vsel %vm1282, 0.0, %v1147
      %v1292 = vsel %vm1283, 0.0, %v1148
      %v1293 = vsel %vm1284, 0.0, %v1149
      %v1294 = vsel %vm1285, 0.0, %v1150
      %v1295 = vsel %vm1286, 0.0, %v1151
      %v1296 = vsel %vm1287, 0.0, %v1152
      %v1297 = vsel %vm1288, 0.0, %v1153
      %v1298 = vsel %vm1289, 0.0, %v1154
      %vm1299 = vcmp.eq.s32.totalorder %v1254, 1
      %vm1300 = vcmp.eq.s32.totalorder %v1255, 1
      %vm1301 = vcmp.eq.s32.totalorder %v1256, 1
      %vm1302 = vcmp.eq.s32.totalorder %v1257, 1
      %vm1303 = vcmp.eq.s32.totalorder %v1258, 1
      %vm1304 = vcmp.eq.s32.totalorder %v1259, 1
      %vm1305 = vcmp.eq.s32.totalorder %v1260, 1
      %vm1306 = vcmp.eq.s32.totalorder %v1261, 1
      %vm1307 = vcmp.eq.s32.totalorder %v1262, 1
      %v1308 = vsel %vm1299, 1, 0
      %v1309 = vsel %vm1300, 1, 0
      %v1310 = vsel %vm1301, 1, 0
      %v1311 = vsel %vm1302, 1, 0
      %v1312 = vsel %vm1303, 1, 0
      %v1313 = vsel %vm1304, 1, 0
      %v1314 = vsel %vm1305, 1, 0
      %v1315 = vsel %vm1306, 1, 0
      %v1316 = vsel %vm1307, 1, 0
      %vm1317 = vcmp.eq.s32.totalorder %v1308, 1
      %vm1318 = vcmp.eq.s32.totalorder %v1309, 1
      %vm1319 = vcmp.eq.s32.totalorder %v1310, 1
      %vm1320 = vcmp.eq.s32.totalorder %v1311, 1
      %vm1321 = vcmp.eq.s32.totalorder %v1312, 1
      %vm1322 = vcmp.eq.s32.totalorder %v1313, 1
      %vm1323 = vcmp.eq.s32.totalorder %v1314, 1
      %vm1324 = vcmp.eq.s32.totalorder %v1315, 1
      %vm1325 = vcmp.eq.s32.totalorder %v1316, 1
      %v1326 = vsel %vm1317, 0.0, %v1146
      %v1327 = vsel %vm1318, 0.0, %v1147
      %v1328 = vsel %vm1319, 0.0, %v1148
      %v1329 = vsel %vm1320, 0.0, %v1149
      %v1330 = vsel %vm1321, 0.0, %v1150
      %v1331 = vsel %vm1322, 0.0, %v1151
      %v1332 = vsel %vm1323, 0.0, %v1152
      %v1333 = vsel %vm1324, 0.0, %v1153
      %v1334 = vsel %vm1325, 0.0, %v1154
      %1344 = vrot.lane.b32.xlu0 %v1146, 127
      %v1345 = vpop.permute.xlu0 %1344
      %1346 = vrot.lane.b32.xlu0 %v1147, 127
      %v1347 = vpop.permute.xlu0 %1346
      %1348 = vrot.lane.b32.xlu0 %v1148, 127
      %v1349 = vpop.permute.xlu0 %1348
      %1350 = vrot.lane.b32.xlu0 %v1149, 127
      %v1351 = vpop.permute.xlu0 %1350
      %1352 = vrot.lane.b32.xlu0 %v1150, 127
      %v1353 = vpop.permute.xlu0 %1352
      %1354 = vrot.lane.b32.xlu0 %v1151, 127
      %v1355 = vpop.permute.xlu0 %1354
      %1356 = vrot.lane.b32.xlu0 %v1152, 127
      %v1357 = vpop.permute.xlu0 %1356
      %1358 = vrot.lane.b32.xlu0 %v1153, 127
      %v1359 = vpop.permute.xlu0 %1358
      %1360 = vrot.lane.b32.xlu0 %v1154, 127
      %v1361 = vpop.permute.xlu0 %1360
      %vm1362 = vcmask 1039360
      %v1363 = vsel %vm1362, %v1345, %v1347
      %v1364 = vsel %vm1362, %v1347, %v1349
      %v1365 = vsel %vm1362, %v1349, %v1351
      %v1366 = vsel %vm1362, %v1351, %v1353
      %v1367 = vsel %vm1362, %v1353, %v1355
      %v1368 = vsel %vm1362, %v1355, %v1357
      %v1369 = vsel %vm1362, %v1357, %v1359
      %v1370 = vsel %vm1362, %v1359, %v1361
      %1388 = vrot.lane.b32.xlu0 %v1326, 126
      %v1389 = vpop.permute.xlu0 %1388
      %1390 = vrot.lane.b32.xlu0 %v1327, 126
      %v1391 = vpop.permute.xlu0 %1390
      %1392 = vrot.lane.b32.xlu0 %v1328, 126
      %v1393 = vpop.permute.xlu0 %1392
      %1394 = vrot.lane.b32.xlu0 %v1329, 126
      %v1395 = vpop.permute.xlu0 %1394
      %1396 = vrot.lane.b32.xlu0 %v1330, 126
      %v1397 = vpop.permute.xlu0 %1396
      %1398 = vrot.lane.b32.xlu0 %v1331, 126
      %v1399 = vpop.permute.xlu0 %1398
      %1400 = vrot.lane.b32.xlu0 %v1332, 126
      %v1401 = vpop.permute.xlu0 %1400
      %1402 = vrot.lane.b32.xlu0 %v1333, 126
      %v1403 = vpop.permute.xlu0 %1402
      %1404 = vrot.lane.b32.xlu0 %v1334, 126
      %v1405 = vpop.permute.xlu0 %1404
      %vm1406 = vcmask 1031168
      %v1407 = vsel %vm1406, %v1389, %v1391
      %v1408 = vsel %vm1406, %v1391, %v1393
      %v1409 = vsel %vm1406, %v1393, %v1395
      %v1410 = vsel %vm1406, %v1395, %v1397
      %v1411 = vsel %vm1406, %v1397, %v1399
      %v1412 = vsel %vm1406, %v1399, %v1401
      %v1413 = vsel %vm1406, %v1401, %v1403
      %v1414 = vsel %vm1406, %v1403, %v1405
      %1432 = vrot.lane.b32.xlu0 %v1290, 96
      %v1433 = vpop.permute.xlu0 %1432
      %1434 = vrot.lane.b32.xlu0 %v1291, 96
      %v1435 = vpop.permute.xlu0 %1434
      %1436 = vrot.lane.b32.xlu0 %v1292, 96
      %v1437 = vpop.permute.xlu0 %1436
      %1438 = vrot.lane.b32.xlu0 %v1293, 96
      %v1439 = vpop.permute.xlu0 %1438
      %1440 = vrot.lane.b32.xlu0 %v1294, 96
      %v1441 = vpop.permute.xlu0 %1440
      %1442 = vrot.lane.b32.xlu0 %v1295, 96
      %v1443 = vpop.permute.xlu0 %1442
      %1444 = vrot.lane.b32.xlu0 %v1296, 96
      %v1445 = vpop.permute.xlu0 %1444
      %1446 = vrot.lane.b32.xlu0 %v1297, 96
      %v1447 = vpop.permute.xlu0 %1446
      %1448 = vrot.lane.b32.xlu0 %v1298, 96
      %v1449 = vpop.permute.xlu0 %1448
      %vm1450 = vcmask 785408
      %v1451 = vsel %vm1450, %v1433, %v1435
      %v1452 = vsel %vm1450, %v1435, %v1437
      %v1453 = vsel %vm1450, %v1437, %v1439
      %v1454 = vsel %vm1450, %v1439, %v1441
      %v1455 = vsel %vm1450, %v1441, %v1443
      %v1456 = vsel %vm1450, %v1443, %v1445
      %v1457 = vsel %vm1450, %v1445, %v1447
      %v1458 = vsel %vm1450, %v1447, %v1449
      %1467 = vrot.lane.b32.xlu0 %v1146, 95
      %v1468 = vpop.permute.xlu0 %1467
      %1469 = vrot.lane.b32.xlu0 %v1147, 95
      %v1470 = vpop.permute.xlu0 %1469
      %1471 = vrot.lane.b32.xlu0 %v1148, 95
      %v1472 = vpop.permute.xlu0 %1471
      %1473 = vrot.lane.b32.xlu0 %v1149, 95
      %v1474 = vpop.permute.xlu0 %1473
      %1475 = vrot.lane.b32.xlu0 %v1150, 95
      %v1476 = vpop.permute.xlu0 %1475
      %1477 = vrot.lane.b32.xlu0 %v1151, 95
      %v1478 = vpop.permute.xlu0 %1477
      %1479 = vrot.lane.b32.xlu0 %v1152, 95
      %v1480 = vpop.permute.xlu0 %1479
      %1481 = vrot.lane.b32.xlu0 %v1153, 95
      %v1482 = vpop.permute.xlu0 %1481
      %1483 = vrot.lane.b32.xlu0 %v1154, 95
      %v1484 = vpop.permute.xlu0 %1483
      %vm1485 = vcmask 777216
      %v1486 = vsel %vm1485, %v1468, %v1470
      %v1487 = vsel %vm1485, %v1470, %v1472
      %v1488 = vsel %vm1485, %v1472, %v1474
      %v1489 = vsel %vm1485, %v1474, %v1476
      %v1490 = vsel %vm1485, %v1476, %v1478
      %v1491 = vsel %vm1485, %v1478, %v1480
      %v1492 = vsel %vm1485, %v1480, %v1482
      %v1493 = vsel %vm1485, %v1482, %v1484
      %1502 = vrot.lane.b32.xlu0 %v1326, 94
      %v1503 = vpop.permute.xlu0 %1502
      %1504 = vrot.lane.b32.xlu0 %v1327, 94
      %v1505 = vpop.permute.xlu0 %1504
      %1506 = vrot.lane.b32.xlu0 %v1328, 94
      %v1507 = vpop.permute.xlu0 %1506
      %1508 = vrot.lane.b32.xlu0 %v1329, 94
      %v1509 = vpop.permute.xlu0 %1508
      %1510 = vrot.lane.b32.xlu0 %v1330, 94
      %v1511 = vpop.permute.xlu0 %1510
      %1512 = vrot.lane.b32.xlu0 %v1331, 94
      %v1513 = vpop.permute.xlu0 %1512
      %1514 = vrot.lane.b32.xlu0 %v1332, 94
      %v1515 = vpop.permute.xlu0 %1514
      %1516 = vrot.lane.b32.xlu0 %v1333, 94
      %v1517 = vpop.permute.xlu0 %1516
      %1518 = vrot.lane.b32.xlu0 %v1334, 94
      %v1519 = vpop.permute.xlu0 %1518
      %vm1520 = vcmask 769024
      %v1521 = vsel %vm1520, %v1503, %v1505
      %v1522 = vsel %vm1520, %v1505, %v1507
      %v1523 = vsel %vm1520, %v1507, %v1509
      %v1524 = vsel %vm1520, %v1509, %v1511
      %v1525 = vsel %vm1520, %v1511, %v1513
      %v1526 = vsel %vm1520, %v1513, %v1515
      %v1527 = vsel %vm1520, %v1515, %v1517
      %v1528 = vsel %vm1520, %v1517, %v1519
      %1537 = vrot.lane.b32.xlu0 %v1290, 64
      %v1538 = vpop.permute.xlu0 %1537
      %1539 = vrot.lane.b32.xlu0 %v1291, 64
      %v1540 = vpop.permute.xlu0 %1539
      %1541 = vrot.lane.b32.xlu0 %v1292, 64
      %v1542 = vpop.permute.xlu0 %1541
      %1543 = vrot.lane.b32.xlu0 %v1293, 64
      %v1544 = vpop.permute.xlu0 %1543
      %1545 = vrot.lane.b32.xlu0 %v1294, 64
      %v1546 = vpop.permute.xlu0 %1545
      %1547 = vrot.lane.b32.xlu0 %v1295, 64
      %v1548 = vpop.permute.xlu0 %1547
      %1549 = vrot.lane.b32.xlu0 %v1296, 64
      %v1550 = vpop.permute.xlu0 %1549
      %1551 = vrot.lane.b32.xlu0 %v1297, 64
      %v1552 = vpop.permute.xlu0 %1551
      %1553 = vrot.lane.b32.xlu0 %v1298, 64
      %v1554 = vpop.permute.xlu0 %1553
      %vm1555 = vcmask 523264
      %v1556 = vsel %vm1555, %v1538, %v1540
      %v1557 = vsel %vm1555, %v1540, %v1542
      %v1558 = vsel %vm1555, %v1542, %v1544
      %v1559 = vsel %vm1555, %v1544, %v1546
      %v1560 = vsel %vm1555, %v1546, %v1548
      %v1561 = vsel %vm1555, %v1548, %v1550
      %v1562 = vsel %vm1555, %v1550, %v1552
      %v1563 = vsel %vm1555, %v1552, %v1554
      %1572 = vrot.lane.b32.xlu0 %v1146, 63
      %v1573 = vpop.permute.xlu0 %1572
      %1574 = vrot.lane.b32.xlu0 %v1147, 63
      %v1575 = vpop.permute.xlu0 %1574
      %1576 = vrot.lane.b32.xlu0 %v1148, 63
      %v1577 = vpop.permute.xlu0 %1576
      %1578 = vrot.lane.b32.xlu0 %v1149, 63
      %v1579 = vpop.permute.xlu0 %1578
      %1580 = vrot.lane.b32.xlu0 %v1150, 63
      %v1581 = vpop.permute.xlu0 %1580
      %1582 = vrot.lane.b32.xlu0 %v1151, 63
      %v1583 = vpop.permute.xlu0 %1582
      %1584 = vrot.lane.b32.xlu0 %v1152, 63
      %v1585 = vpop.permute.xlu0 %1584
      %1586 = vrot.lane.b32.xlu0 %v1153, 63
      %v1587 = vpop.permute.xlu0 %1586
      %1588 = vrot.lane.b32.xlu0 %v1154, 63
      %v1589 = vpop.permute.xlu0 %1588
      %vm1590 = vcmask 515072
      %v1591 = vsel %vm1590, %v1573, %v1575
      %v1592 = vsel %vm1590, %v1575, %v1577
      %v1593 = vsel %vm1590, %v1577, %v1579
      %v1594 = vsel %vm1590, %v1579, %v1581
      %v1595 = vsel %vm1590, %v1581, %v1583
      %v1596 = vsel %vm1590, %v1583, %v1585
      %v1597 = vsel %vm1590, %v1585, %v1587
      %v1598 = vsel %vm1590, %v1587, %v1589
      %1607 = vrot.lane.b32.xlu0 %v1326, 62
      %v1608 = vpop.permute.xlu0 %1607
      %1609 = vrot.lane.b32.xlu0 %v1327, 62
      %v1610 = vpop.permute.xlu0 %1609
      %1611 = vrot.lane.b32.xlu0 %v1328, 62
      %v1612 = vpop.permute.xlu0 %1611
      %1613 = vrot.lane.b32.xlu0 %v1329, 62
      %v1614 = vpop.permute.xlu0 %1613
      %1615 = vrot.lane.b32.xlu0 %v1330, 62
      %v1616 = vpop.permute.xlu0 %1615
      %1617 = vrot.lane.b32.xlu0 %v1331, 62
      %v1618 = vpop.permute.xlu0 %1617
      %1619 = vrot.lane.b32.xlu0 %v1332, 62
      %v1620 = vpop.permute.xlu0 %1619
      %1621 = vrot.lane.b32.xlu0 %v1333, 62
      %v1622 = vpop.permute.xlu0 %1621
      %1623 = vrot.lane.b32.xlu0 %v1334, 62
      %v1624 = vpop.permute.xlu0 %1623
      %vm1625 = vcmask 506880
      %v1626 = vsel %vm1625, %v1608, %v1610
      %v1627 = vsel %vm1625, %v1610, %v1612
      %v1628 = vsel %vm1625, %v1612, %v1614
      %v1629 = vsel %vm1625, %v1614, %v1616
      %v1630 = vsel %vm1625, %v1616, %v1618
      %v1631 = vsel %vm1625, %v1618, %v1620
      %v1632 = vsel %vm1625, %v1620, %v1622
      %v1633 = vsel %vm1625, %v1622, %v1624
      %v1642 = vpack.c.bf16 %v1363, %v1290
      %v1643 = vpack.c.bf16 %v1364, %v1291
      %v1644 = vpack.c.bf16 %v1365, %v1292
      %v1645 = vpack.c.bf16 %v1366, %v1293
      %v1646 = vpack.c.bf16 %v1367, %v1294
      %v1647 = vpack.c.bf16 %v1368, %v1295
      %v1648 = vpack.c.bf16 %v1369, %v1296
      %v1649 = vpack.c.bf16 %v1370, %v1297
      %v1650 = vpack.c.bf16 %v1451, %v1407
      %v1651 = vpack.c.bf16 %v1452, %v1408
      %v1652 = vpack.c.bf16 %v1453, %v1409
      %v1653 = vpack.c.bf16 %v1454, %v1410
      %v1654 = vpack.c.bf16 %v1455, %v1411
      %v1655 = vpack.c.bf16 %v1456, %v1412
      %v1656 = vpack.c.bf16 %v1457, %v1413
      %v1657 = vpack.c.bf16 %v1458, %v1414
      %v1658 = vpack.c.bf16 %v1521, %v1486
      %v1659 = vpack.c.bf16 %v1522, %v1487
      %v1660 = vpack.c.bf16 %v1523, %v1488
      %v1661 = vpack.c.bf16 %v1524, %v1489
      %v1662 = vpack.c.bf16 %v1525, %v1490
      %v1663 = vpack.c.bf16 %v1526, %v1491
      %v1664 = vpack.c.bf16 %v1527, %v1492
      %v1665 = vpack.c.bf16 %v1528, %v1493
      %v1666 = vpack.c.bf16 %v1591, %v1556
      %v1667 = vpack.c.bf16 %v1592, %v1557
      %v1668 = vpack.c.bf16 %v1593, %v1558
      %v1669 = vpack.c.bf16 %v1594, %v1559
      %v1670 = vpack.c.bf16 %v1595, %v1560
      %v1671 = vpack.c.bf16 %v1596, %v1561
      %v1672 = vpack.c.bf16 %v1597, %v1562
      %v1673 = vpack.c.bf16 %v1598, %v1563
      %v1674 = vpack.c.bf16 %v1626, %v1626
      %v1675 = vpack.c.bf16 %v1627, %v1627
      %v1676 = vpack.c.bf16 %v1628, %v1628
      %v1677 = vpack.c.bf16 %v1629, %v1629
      %v1678 = vpack.c.bf16 %v1630, %v1630
      %v1679 = vpack.c.bf16 %v1631, %v1631
      %v1680 = vpack.c.bf16 %v1632, %v1632
      %v1681 = vpack.c.bf16 %v1633, %v1633
      %v1682 = vld [vmem:[%s4] sm:$0xf]
      %v1683 = vld [vmem:[%s5] sm:$0xff]
      %1685 = vset.pattern.permute.xlu0 0
      %1686 = vperm.xlu0 %1685, %v1683
      %v1687 = vpop.permute.xlu0 %1686
      %vm1689 = vcmask 588800
      %v1691 = vsel %vm1689, %v1682, 0
      %vm1693 = vcmask 1043456
      %v1695 = vsel %vm1693, %v1674, 0
      %v1698 = vsel %vm1693, %v1675, 0
      %v1701 = vsel %vm1693, %v1676, 0
      %v1704 = vsel %vm1693, %v1677, 0
      %v1707 = vsel %vm1693, %v1678, 0
      %v1710 = vsel %vm1693, %v1679, 0
      %v1713 = vsel %vm1693, %v1680, 0
      %v1716 = vsel %vm1693, %v1681, 0
      %1718 = vmatprep.subr.bf16.mxu0 %v1643
      %1719 = vmatpush1.bf16.msra.mxu0 %v1642
      %1720 = vmatprep.subr.bf16.mxu0 %v1651
      %1721 = vmatpush1.bf16.msra.mxu0 %v1650
      %1722 = vmatprep.subr.bf16.mxu0 %v1659
      %1723 = vmatpush1.bf16.msra.mxu0 %v1658
      %1724 = vmatprep.subr.bf16.mxu0 %v1667
      %1725 = vmatpush1.bf16.msra.mxu0 %v1666
      %1726 = vmatprep.subr.bf16.mxu0 %v1698
      %1727 = vmatpush1.bf16.msra.mxu0 %v1695
      %1728 = vmatprep.subr.bf16.mxu0 0
      %1729 = vmatpush1.bf16.msra.mxu0 0
      %1730 = vmatprep.subr.bf16.mxu0 0
      %1731 = vmatpush1.bf16.msra.mxu0 0
      %1732 = vmatprep.subr.bf16.mxu0 0
      %1733 = vmatpush1.bf16.msra.mxu0 0
      %1734 = vmatprep.subr.bf16.mxu0 0
      %1735 = vmatpush1.bf16.msra.mxu0 0
      %1736 = vmatprep.subr.bf16.mxu0 0
      %1737 = vmatpush1.bf16.msra.mxu0 0
      %1738 = vmatprep.subr.bf16.mxu0 0
      %1739 = vmatpush1.bf16.msra.mxu0 0
      %1740 = vmatprep.subr.bf16.mxu0 0
      %1741 = vmatpush1.bf16.msra.mxu0 0
      %1742 = vmatprep.subr.bf16.mxu0 0
      %1743 = vmatpush1.bf16.msra.mxu0 0
      %1744 = vmatprep.subr.bf16.mxu0 0
      %1745 = vmatpush1.bf16.msra.mxu0 0
      %1746 = vmatprep.subr.bf16.mxu0 0
      %1747 = vmatpush1.bf16.msra.mxu0 0
      %1748 = vmatprep.subr.bf16.mxu0 0
      %1749 = vmatpush1.bf16.msra.mxu0 0
      %1750 = vmatprep.mubr.bf16.mxu0 0
      %1751 = vmatmul.mubr.bf16.gmra.mrb[0].mxu0 %v1691
      %v1752 = vpop.f32.mrb[0].mxu0
      %v1753 = vadd.f32 %v1687, %v1752
      %v1754 = vpop.f32.mrb[0].mxu0
      %v1755 = vadd.f32 %v1687, %v1754
      %v1756 = vpop.f32.mrb[0].mxu0
      %v1757 = vpop.f32.mrb[0].mxu0
      %1758 = vdwg.mxu0
      %1759 = vmatprep.subr.bf16.mxu0 %v1645
      %1760 = vmatpush1.bf16.msra.mxu0 %v1644
      %1761 = vmatprep.subr.bf16.mxu0 %v1653
      %1762 = vmatpush1.bf16.msra.mxu0 %v1652
      %1763 = vmatprep.subr.bf16.mxu0 %v1661
      %1764 = vmatpush1.bf16.msra.mxu0 %v1660
      %1765 = vmatprep.subr.bf16.mxu0 %v1669
      %1766 = vmatpush1.bf16.msra.mxu0 %v1668
      %1767 = vmatprep.subr.bf16.mxu0 %v1704
      %1768 = vmatpush1.bf16.msra.mxu0 %v1701
      %1769 = vmatprep.subr.bf16.mxu0 0
      %1770 = vmatpush1.bf16.msra.mxu0 0
      %1771 = vmatprep.subr.bf16.mxu0 0
      %1772 = vmatpush1.bf16.msra.mxu0 0
      %1773 = vmatprep.subr.bf16.mxu0 0
      %1774 = vmatpush1.bf16.msra.mxu0 0
      %1775 = vmatprep.subr.bf16.mxu0 0
      %1776 = vmatpush1.bf16.msra.mxu0 0
      %1777 = vmatprep.subr.bf16.mxu0 0
      %1778 = vmatpush1.bf16.msra.mxu0 0
      %1779 = vmatprep.subr.bf16.mxu0 0
      %1780 = vmatpush1.bf16.msra.mxu0 0
      %1781 = vmatprep.subr.bf16.mxu0 0
      %1782 = vmatpush1.bf16.msra.mxu0 0
      %1783 = vmatprep.subr.bf16.mxu0 0
      %1784 = vmatpush1.bf16.msra.mxu0 0
      %1785 = vmatprep.subr.bf16.mxu0 0
      %1786 = vmatpush1.bf16.msra.mxu0 0
      %1787 = vmatprep.subr.bf16.mxu0 0
      %1788 = vmatpush1.bf16.msra.mxu0 0
      %1789 = vmatprep.subr.bf16.mxu0 0
      %1790 = vmatpush1.bf16.msra.mxu0 0
      %1791 = vmatprep.mubr.bf16.mxu0 0
      %1792 = vmatmul.mubr.bf16.gmra.mrb[0].mxu0 %v1691
      %v1793 = vpop.f32.mrb[0].mxu0
      %v1794 = vadd.f32 %v1687, %v1793
      %v1795 = vpop.f32.mrb[0].mxu0
      %v1796 = vadd.f32 %v1687, %v1795
      %v1797 = vpop.f32.mrb[0].mxu0
      %v1798 = vpop.f32.mrb[0].mxu0
      %1799 = vdwg.mxu0
      %1800 = vmatprep.subr.bf16.mxu0 %v1647
      %1801 = vmatpush1.bf16.msra.mxu0 %v1646
      %1802 = vmatprep.subr.bf16.mxu0 %v1655
      %1803 = vmatpush1.bf16.msra.mxu0 %v1654
      %1804 = vmatprep.subr.bf16.mxu0 %v1663
      %1805 = vmatpush1.bf16.msra.mxu0 %v1662
      %1806 = vmatprep.subr.bf16.mxu0 %v1671
      %1807 = vmatpush1.bf16.msra.mxu0 %v1670
      %1808 = vmatprep.subr.bf16.mxu0 %v1710
      %1809 = vmatpush1.bf16.msra.mxu0 %v1707
      %1810 = vmatprep.subr.bf16.mxu0 0
      %1811 = vmatpush1.bf16.msra.mxu0 0
      %1812 = vmatprep.subr.bf16.mxu0 0
      %1813 = vmatpush1.bf16.msra.mxu0 0
      %1814 = vmatprep.subr.bf16.mxu0 0
      %1815 = vmatpush1.bf16.msra.mxu0 0
      %1816 = vmatprep.subr.bf16.mxu0 0
      %1817 = vmatpush1.bf16.msra.mxu0 0
      %1818 = vmatprep.subr.bf16.mxu0 0
      %1819 = vmatpush1.bf16.msra.mxu0 0
      %1820 = vmatprep.subr.bf16.mxu0 0
      %1821 = vmatpush1.bf16.msra.mxu0 0
      %1822 = vmatprep.subr.bf16.mxu0 0
      %1823 = vmatpush1.bf16.msra.mxu0 0
      %1824 = vmatprep.subr.bf16.mxu0 0
      %1825 = vmatpush1.bf16.msra.mxu0 0
      %1826 = vmatprep.subr.bf16.mxu0 0
      %1827 = vmatpush1.bf16.msra.mxu0 0
      %1828 = vmatprep.subr.bf16.mxu0 0
      %1829 = vmatpush1.bf16.msra.mxu0 0
      %1830 = vmatprep.subr.bf16.mxu0 0
      %1831 = vmatpush1.bf16.msra.mxu0 0
      %1832 = vmatprep.mubr.bf16.mxu0 0
      %1833 = vmatmul.mubr.bf16.gmra.mrb[0].mxu0 %v1691
      %v1834 = vpop.f32.mrb[0].mxu0
      %v1835 = vadd.f32 %v1687, %v1834
      %v1836 = vpop.f32.mrb[0].mxu0
      %v1837 = vadd.f32 %v1687, %v1836
      %v1838 = vpop.f32.mrb[0].mxu0
      %v1839 = vpop.f32.mrb[0].mxu0
      %1840 = vdwg.mxu0
      %1841 = vmatprep.subr.bf16.mxu0 %v1649
      %1842 = vmatpush1.bf16.msra.mxu0 %v1648
      %1843 = vmatprep.subr.bf16.mxu0 %v1657
      %1844 = vmatpush1.bf16.msra.mxu0 %v1656
      %1845 = vmatprep.subr.bf16.mxu0 %v1665
      %1846 = vmatpush1.bf16.msra.mxu0 %v1664
      %1847 = vmatprep.subr.bf16.mxu0 %v1673
      %1848 = vmatpush1.bf16.msra.mxu0 %v1672
      %1849 = vmatprep.subr.bf16.mxu0 %v1716
      %1850 = vmatpush1.bf16.msra.mxu0 %v1713
      %1851 = vmatprep.subr.bf16.mxu0 0
      %1852 = vmatpush1.bf16.msra.mxu0 0
      %1853 = vmatprep.subr.bf16.mxu0 0
      %1854 = vmatpush1.bf16.msra.mxu0 0
      %1855 = vmatprep.subr.bf16.mxu0 0
      %1856 = vmatpush1.bf16.msra.mxu0 0
      %1857 = vmatprep.subr.bf16.mxu0 0
      %1858 = vmatpush1.bf16.msra.mxu0 0
      %1859 = vmatprep.subr.bf16.mxu0 0
      %1860 = vmatpush1.bf16.msra.mxu0 0
      %1861 = vmatprep.subr.bf16.mxu0 0
      %1862 = vmatpush1.bf16.msra.mxu0 0
      %1863 = vmatprep.subr.bf16.mxu0 0
      %1864 = vmatpush1.bf16.msra.mxu0 0
      %1865 = vmatprep.subr.bf16.mxu0 0
      %1866 = vmatpush1.bf16.msra.mxu0 0
      %1867 = vmatprep.subr.bf16.mxu0 0
      %1868 = vmatpush1.bf16.msra.mxu0 0
      %1869 = vmatprep.subr.bf16.mxu0 0
      %1870 = vmatpush1.bf16.msra.mxu0 0
      %1871 = vmatprep.subr.bf16.mxu0 0
      %1872 = vmatpush1.bf16.msra.mxu0 0
      %1873 = vmatprep.mubr.bf16.mxu0 0
      %1874 = vmatmul.mubr.bf16.gmra.mrb[0].mxu0 %v1691
      %v1875 = vpop.f32.mrb[0].mxu0
      %v1876 = vadd.f32 %v1687, %v1875
      %v1877 = vpop.f32.mrb[0].mxu0
      %v1878 = vadd.f32 %v1687, %v1877
      %v1879 = vpop.f32.mrb[0].mxu0
      %v1880 = vpop.f32.mrb[0].mxu0
      %1881 = vdwg.mxu0
      %v1882 = vmax.f32 %v1753, 0.0
      %v1883 = vmax.f32 %v1755, 0.0
      %v1884 = vmax.f32 %v1794, 0.0
      %v1885 = vmax.f32 %v1796, 0.0
      %v1886 = vmax.f32 %v1835, 0.0
      %v1887 = vmax.f32 %v1837, 0.0
      %v1888 = vmax.f32 %v1876, 0.0
      %v1889 = vmax.f32 %v1878, 0.0
      %1890 = vst [vmem:[%s271] sm:$0xff] %v1882
      %1891 = vst [vmem:[%s271 + $0x8] sm:$0xff] %v1883
      %1892 = vst [vmem:[%s271 + $0x10] sm:$0xff] %v1884
      %1893 = vst [vmem:[%s271 + $0x18] sm:$0xff] %v1885
      %1894 = vst [vmem:[%s271 + $0x20] sm:$0xff] %v1886
      %1895 = vst [vmem:[%s271 + $0x28] sm:$0xff] %v1887
      %1896 = vst [vmem:[%s271 + $0x30] sm:$0xff] %v1888
      %1897 = vst [vmem:[%s271 + $0x38] sm:$0xff] %v1889
      %p1898 = scmp.lt.s32.totalorder %s17, 1
      %s1899 = scalar_select %p1898, %s17, 1
      %s1900 = smul.addr %s1899, 8
      %s1901 = smul.addr %s1900, 8
      %s1902 = scalar_lea.vmem %s6, %s1901
      // Predicated region
      $region45: #{upsample_conv_forward.1} parent=43 // pred_check
        %p1903 = pneg %p171
      $region46: #{upsample_conv_forward.1} parent=43 // pred_check_branch
        %1905 = sbr.rel (%p1903) target = $region48
      $region47: #{upsample_conv_forward.1} parent=43 // pred_region
        _
      $region48: #{upsample_conv_forward.1} parent=43 // pred_fallthru
        _
    $region44: #{upsample_conv_forward.1} parent=5 // pred_fallthru
      _
    %p1906 = scmp.le.s32.totalorder 2, %s12
    // Predicated region
    $region49: #{upsample_conv_forward.1} parent=5 // pred_check
      %p1907 = pneg %p1906
    $region50: #{upsample_conv_forward.1} parent=5 // pred_check_branch
      %1909 = sbr.rel (%p1907) target = $region52
    $region51: #{upsample_conv_forward.1} parent=5 // pred_region
      %s1910 = ssub.s32 %s12, 2
      // Predicated region
      $region53: #{upsample_conv_forward.1} parent=51 // pred_check
        %p1911 = pneg %p177
      $region54: #{upsample_conv_forward.1} parent=51 // pred_check_branch
        %1913 = sbr.rel (%p1911) target = $region56
      $region55: #{upsample_conv_forward.1} parent=51 // pred_region
        %p1914 = scmp.lt.s32.totalorder %s18, 1
        %s1915 = scalar_select %p1914, %s18, 1
        %s1916 = smul.addr %s1915, 8
        %s1917 = smul.addr %s1916, 8
        %s1918 = scalar_lea.vmem %s6, %s1917
      $region56: #{upsample_conv_forward.1} parent=51 // pred_fallthru
        _
    $region52: #{upsample_conv_forward.1} parent=5 // pred_fallthru
      _
  $region6: #{upsample_conv_forward.1} parent=0 // loop_footer
    %s16 = sadd.s32 1, %s12
  $region7: #{upsample_conv_forward.1} parent=0 // loop_footer_branch
    %11 = sbr.rel target = $region3
  $region8: #{upsample_conv_forward.1} parent=0 // loop_exit
    _

</llo_original>
